<compile_context>
chip_gen: v7x
topology: tpu7x:2x2x1
jax: 0.10.0
libtpu: 0.0.40
codegen_flags: <defaults>
</compile_context>

<pallas_src>
import jax
import jax.numpy as jnp
from jax.experimental import pallas as pl
from jax.experimental.pallas import tpu as pltpu


def _round_up(n, m):
    return ((n + m - 1) // m) * m


# ---------------------------------------------------------------------------
# Fused VAE forward kernel
# ---------------------------------------------------------------------------

def _make_fused_vae_kernel(z_dim, sample_z):
    """Builds the kernel for a static sample_z (training & variational) flag.

    Refs (per batch tile of TB rows):
      x:[TB,D] f32; (eps:[TB,P] f32 if sample_z); w1:[D,H] bf16; b1:[1,H] f32;
      wh:[H,P] bf16 = [wmu|wlv|0]; bh:[1,P] f32; w3:[Z,H] bf16; b3:[1,H] f32;
      w4:[H,D] bf16; b4:[1,D] f32.
    Outputs: dec [TB,D] f32, mulv [TB,P] f32 (lane-dense slab [mu|logvar|0]).
    """

    def kernel(*refs):
        if sample_z:
            (x_ref, eps_ref, w1_ref, b1_ref, wh_ref, bh_ref,
             w3_ref, b3_ref, w4_ref, b4_ref, dec_ref, mulv_ref) = refs
        else:
            (x_ref, w1_ref, b1_ref, wh_ref, bh_ref,
             w3_ref, b3_ref, w4_ref, b4_ref, dec_ref, mulv_ref) = refs
            eps_ref = None

        # ---- encoder -----------------------------------------------------
        xb = x_ref[...].astype(jnp.bfloat16)          # in-kernel cast (free VPU)
        h = jnp.dot(xb, w1_ref[...], preferred_element_type=jnp.float32)
        h = jnp.maximum(h + b1_ref[...], 0.0)         # ReLU in f32
        slab = jnp.dot(h.astype(jnp.bfloat16), wh_ref[...],
                       preferred_element_type=jnp.float32) + bh_ref[...]
        mulv_ref[...] = slab                           # lane-dense [mu|logvar|0]

        mu = slab[:, :z_dim]

        # ---- reparameterize (static branch) --------------------------------
        if sample_z:
            logvar = slab[:, z_dim:2 * z_dim]
            eps = eps_ref[:, :z_dim]
            z = eps * jnp.exp(0.5 * logvar) + mu
        else:
            z = mu

        # ---- decoder -------------------------------------------------------
        h2 = jnp.dot(z.astype(jnp.bfloat16), w3_ref[...],
                     preferred_element_type=jnp.float32)
        h2 = jnp.maximum(h2 + b3_ref[...], 0.0)        # ReLU in f32
        logits = jnp.dot(h2.astype(jnp.bfloat16), w4_ref[...],
                         preferred_element_type=jnp.float32) + b4_ref[...]
        dec_ref[...] = jax.nn.sigmoid(logits)          # Sigmoid in f32

    return kernel


# ---------------------------------------------------------------------------
# pallas_call wrapper
# ---------------------------------------------------------------------------

def vae_forward_fused(x_flat, params, eps, *, sample_z):
    """x_flat: [B, D] float32; params from pack_params();
    eps: [B, P] float32 standard normal (only used when sample_z)."""
    B, D = x_flat.shape
    H = params["w1"].shape[1]
    Z = params["w3"].shape[0]
    P = params["wh"].shape[1]

    # Row tile: whole batch when small, else 256-row tiles (MXU-friendly,
    # bounded VMEM, pipelined x/dec DMA, megacore-shardable on v7x).
    TB = B if B <= 256 else 256
    Bp = _round_up(B, TB)
    if Bp != B:
        x_flat = jnp.pad(x_flat, ((0, Bp - B), (0, 0)))
        if sample_z:
            eps = jnp.pad(eps, ((0, Bp - B), (0, 0)))
    grid = (Bp // TB,)

    weights = (params["w1"], params["b1"], params["wh"], params["bh"],
               params["w3"], params["b3"], params["w4"], params["b4"])
    # Constant index_map -> weights DMA'd once, VMEM-resident across all tiles.
    w_specs = [pl.BlockSpec(w.shape, lambda i: (0, 0)) for w in weights]

    row_spec = lambda cols: pl.BlockSpec((TB, cols), lambda i: (i, 0))

    in_arrays = (x_flat,) + ((eps,) if sample_z else ()) + weights
    in_specs = ([row_spec(D)]
                + ([row_spec(P)] if sample_z else [])
                + w_specs)

    w_bytes = sum(int(a.size) * a.dtype.itemsize for a in weights)
    cost = pl.CostEstimate(
        flops=2 * Bp * (D * H + H * P + Z * H + H * D),
        transcendentals=Bp * (D + (Z if sample_z else 0)),
        bytes_accessed=(Bp * D * 4 + (Bp * P * 4 if sample_z else 0)
                        + w_bytes + Bp * D * 4 + Bp * P * 4),
    )

    kernel = _make_fused_vae_kernel(Z, sample_z)
    dec, mulv = pl.pallas_call(
        kernel,
        grid=grid,
        out_shape=(jax.ShapeDtypeStruct((Bp, D), jnp.float32),
                   jax.ShapeDtypeStruct((Bp, P), jnp.float32)),
        in_specs=in_specs,
        out_specs=(row_spec(D), row_spec(P)),
        compiler_params=pltpu.CompilerParams(
            dimension_semantics=("parallel",)),   # v7x: both TCs share batch
        cost_estimate=cost,
    )(*in_arrays)

    dec = dec[:B]
    mu = mulv[:B, :Z]
    logvar = mulv[:B, Z:2 * Z]
    return dec, mu, logvar


def base_vae_forward(x, params, rng_key, *, variational=False, training=False):
    """x: NCHW float32. Returns ((decoded NCHW, mu, logvar), metadata)."""
    B, C, H, W = x.shape
    x_flat = x.reshape(B, C * H * W)                 # torch .view(B, -1)
    Z = params["w3"].shape[0]
    P = params["wh"].shape[1]
    sample_z = bool(training and variational)
    if sample_z:
        # eps ~ N(0,1); caller varies rng_key per step for fresh noise.
        eps = jax.random.normal(rng_key, (B, P), dtype=jnp.float32)
    else:
        eps = None
    dec_flat, mu, logvar = vae_forward_fused(x_flat, params, eps,
                                             sample_z=sample_z)
    metadata = {"z_size": Z}                         # self.metadata['z_size']
    decoded = dec_flat.reshape(B, C, H, W)
    return (decoded, mu, logvar), metadata


# ---------------------------------------------------------------------------
# Parameters
# ---------------------------------------------------------------------------

def init_raw_params(key, d_in, hidden, z_dim):
    ks = jax.random.split(key, 5)
    s = lambda fan_in: 1.0 / jnp.sqrt(fan_in)
    return {
        "w1":  jax.random.normal(ks[0], (d_in, hidden), jnp.float32) * s(d_in),
        "b1":  jnp.zeros((1, hidden), jnp.float32),
        "wmu": jax.random.normal(ks[1], (hidden, z_dim), jnp.float32) * s(hidden),
        "bmu": jnp.zeros((1, z_dim), jnp.float32),
        "wlv": jax.random.normal(ks[2], (hidden, z_dim), jnp.float32) * s(hidden),
        "blv": jnp.zeros((1, z_dim), jnp.float32),
        "w3":  jax.random.normal(ks[3], (z_dim, hidden), jnp.float32) * s(z_dim),
        "b3":  jnp.zeros((1, hidden), jnp.float32),
        "w4":  jax.random.normal(ks[4], (hidden, d_in), jnp.float32) * s(hidden),
        "b4":  jnp.zeros((1, d_in), jnp.float32),
    }


def pack_params(raw):
    """Concat mu/logvar heads into one lane-dense [H, 128] weight; bf16 weights,
    f32 biases.  (bf16 MXU path is the portable fast choice on v5e/v6e/v7x;
    int8 weights would not map to v7x's fp8-only MXU.)"""
    hidden, z_dim = raw["wmu"].shape
    pad = _round_up(2 * z_dim, 128)
    wh = jnp.zeros((hidden, pad), jnp.float32)
    wh = wh.at[:, :z_dim].set(raw["wmu"]).at[:, z_dim:2 * z_dim].set(raw["wlv"])
    bh = jnp.zeros((1, pad), jnp.float32)
    bh = bh.at[:, :z_dim].set(raw["bmu"]).at[:, z_dim:2 * z_dim].set(raw["blv"])
    return {
        "w1": raw["w1"].astype(jnp.bfloat16), "b1": raw["b1"],
        "wh": wh.astype(jnp.bfloat16),        "bh": bh,
        "w3": raw["w3"].astype(jnp.bfloat16), "b3": raw["b3"],
        "w4": raw["w4"].astype(jnp.bfloat16), "b4": raw["b4"],
    }


# ---------------------------------------------------------------------------
# Test
# ---------------------------------------------------------------------------

if __name__ == "__main__":
    key = jax.random.PRNGKey(0)
    k_x, k_p, k_eps = jax.random.split(key, 3)

    B, C, H, W = 2, 4, 16, 16
    HIDDEN, ZDIM = 128, 32
    D = C * H * W

    x = jax.random.normal(k_x, (B, C, H, W), dtype=jnp.float32)
    raw = init_raw_params(k_p, D, HIDDEN, ZDIM)
    params = pack_params(raw)
    P = params["wh"].shape[1]

    fwd = jax.jit(base_vae_forward, static_argnames=("variational", "training"))

    # ---- eval / non-variational path (z = mu), matches PyTorch exactly ----
    (decoded, mu, logvar), metadata = fwd(x, params, k_eps,
                                          variational=False, training=False)
    jax.block_until_ready(decoded)
    jax.block_until_ready(mu)
    jax.block_until_ready(logvar)

    assert decoded.shape == (B, C, H, W)
    assert mu.shape == (B, ZDIM) and logvar.shape == (B, ZDIM)
    assert int(metadata["z_size"]) == ZDIM

    # Pure-JAX reference with identical bf16 operands / f32 accumulation.
    f32 = jnp.float32
    xb = x.reshape(B, D).astype(jnp.bfloat16)
    h1 = jnp.maximum(jnp.dot(xb, raw["w1"].astype(jnp.bfloat16),
                             preferred_element_type=f32) + raw["b1"], 0.0)
    h1b = h1.astype(jnp.bfloat16)
    mu_ref = jnp.dot(h1b, raw["wmu"].astype(jnp.bfloat16),
                     preferred_element_type=f32) + raw["bmu"]
    lv_ref = jnp.dot(h1b, raw["wlv"].astype(jnp.bfloat16),
                     preferred_element_type=f32) + raw["blv"]

    def decode_ref(z_f32):
        h2 = jnp.maximum(jnp.dot(z_f32.astype(jnp.bfloat16),
                                 raw["w3"].astype(jnp.bfloat16),
                                 preferred_element_type=f32) + raw["b3"], 0.0)
        out = jax.nn.sigmoid(jnp.dot(h2.astype(jnp.bfloat16),
                                     raw["w4"].astype(jnp.bfloat16),
                                     preferred_element_type=f32) + raw["b4"])
        return out.reshape(B, C, H, W)

    dec_ref = decode_ref(mu_ref)
    assert jnp.allclose(mu, mu_ref, atol=1e-2, rtol=1e-2)
    assert jnp.allclose(logvar, lv_ref, atol=1e-2, rtol=1e-2)
    assert jnp.allclose(decoded, dec_ref, atol=1e-2, rtol=1e-2)

    # ---- training + variational path (z = eps*std + mu) -------------------
    (dec_t, mu_t, lv_t), _ = fwd(x, params, k_eps,
                                 variational=True, training=True)
    jax.block_until_ready(dec_t)
    assert dec_t.shape == (B, C, H, W)
    assert bool(jnp.all(jnp.isfinite(dec_t)))
    assert bool(jnp.all((dec_t >= 0.0) & (dec_t <= 1.0)))   # sigmoid range
    # mu / logvar do not depend on eps.
    assert jnp.allclose(mu_t, mu_ref, atol=1e-2, rtol=1e-2)
    assert jnp.allclose(lv_t, lv_ref, atol=1e-2, rtol=1e-2)
    # dec reference with the exact same eps the wrapper draws.
    eps_full = jax.random.normal(k_eps, (B, P), dtype=jnp.float32)
    z_ref = eps_full[:, :ZDIM] * jnp.exp(0.5 * lv_ref) + mu_ref
    dec_t_ref = decode_ref(z_ref)
    assert jnp.allclose(dec_t, dec_t_ref, atol=1e-2, rtol=1e-2)

    print("KERNEL_OK")
</pallas_src>

<mosaic_0001>
module attributes {stable_mosaic.version = 11 : i64} {
  func.func @kernel(%arg0: i32, %arg1: memref<2x1024xf32, #tpu.memory_space<vmem>>, %arg2: memref<1024x128xbf16, #tpu.memory_space<vmem>>, %arg3: memref<1x128xf32, #tpu.memory_space<vmem>>, %arg4: memref<128x128xbf16, #tpu.memory_space<vmem>>, %arg5: memref<1x128xf32, #tpu.memory_space<vmem>>, %arg6: memref<32x128xbf16, #tpu.memory_space<vmem>>, %arg7: memref<1x128xf32, #tpu.memory_space<vmem>>, %arg8: memref<128x1024xbf16, #tpu.memory_space<vmem>>, %arg9: memref<1x1024xf32, #tpu.memory_space<vmem>>, %arg10: memref<2x1024xf32, #tpu.memory_space<vmem>>, %arg11: memref<2x128xf32, #tpu.memory_space<vmem>>) attributes {dimension_semantics = [#tpu.dimension_semantics<parallel>], iteration_bounds = array<i64: 1>, scalar_prefetch = 0 : i64, scratch_operands = 0 : i64, tpu.core_type = #tpu.core_type<tc>, window_params = [{transform_indices = @transform_0, window_bounds = array<i64: 2, 1024>}, {pipeline_mode = #tpu.pipeline_mode<synchronous>, transform_indices = @transform_1, window_bounds = array<i64: 1024, 128>}, {pipeline_mode = #tpu.pipeline_mode<synchronous>, transform_indices = @transform_2, window_bounds = array<i64: 1, 128>}, {pipeline_mode = #tpu.pipeline_mode<synchronous>, transform_indices = @transform_3, window_bounds = array<i64: 128, 128>}, {pipeline_mode = #tpu.pipeline_mode<synchronous>, transform_indices = @transform_4, window_bounds = array<i64: 1, 128>}, {pipeline_mode = #tpu.pipeline_mode<synchronous>, transform_indices = @transform_5, window_bounds = array<i64: 32, 128>}, {pipeline_mode = #tpu.pipeline_mode<synchronous>, transform_indices = @transform_6, window_bounds = array<i64: 1, 128>}, {pipeline_mode = #tpu.pipeline_mode<synchronous>, transform_indices = @transform_7, window_bounds = array<i64: 128, 1024>}, {pipeline_mode = #tpu.pipeline_mode<synchronous>, transform_indices = @transform_8, window_bounds = array<i64: 1, 1024>}, {transform_indices = @transform_9, window_bounds = array<i64: 2, 1024>}, {transform_indices = @transform_10, window_bounds = array<i64: 2, 128>}]} {
    %c0 = arith.constant 0 : index
    %c0_0 = arith.constant 0 : index
    %0 = vector.load %arg1[%c0, %c0_0] : memref<2x1024xf32, #tpu.memory_space<vmem>>, vector<2x1024xf32>
    %1 = arith.truncf %0 : vector<2x1024xf32> to vector<2x1024xbf16>
    %c0_1 = arith.constant 0 : index
    %c0_2 = arith.constant 0 : index
    %2 = vector.load %arg2[%c0_1, %c0_2] : memref<1024x128xbf16, #tpu.memory_space<vmem>>, vector<1024x128xbf16>
    %cst = arith.constant dense<0.000000e+00> : vector<2x128xf32>
    %3 = tpu.matmul %1, %2, %cst {dimension_numbers = #tpu.dot_dimension_numbers<[1], [0], [0], [1], [0, 0, 1, 1], [], []>} : vector<2x1024xbf16>, vector<1024x128xbf16>, vector<2x128xf32> -> vector<2x128xf32>
    %c0_3 = arith.constant 0 : index
    %c0_4 = arith.constant 0 : index
    %4 = vector.load %arg3[%c0_3, %c0_4] : memref<1x128xf32, #tpu.memory_space<vmem>>, vector<1x128xf32>
    %5 = vector.broadcast %4 : vector<1x128xf32> to vector<2x128xf32>
    %6 = arith.addf %3, %5 : vector<2x128xf32>
    %cst_5 = arith.constant 0.000000e+00 : f32
    %7 = vector.broadcast %cst_5 : f32 to vector<2x128xf32>
    %8 = arith.maximumf %6, %7 : vector<2x128xf32>
    %9 = arith.truncf %8 : vector<2x128xf32> to vector<2x128xbf16>
    %c0_6 = arith.constant 0 : index
    %c0_7 = arith.constant 0 : index
    %10 = vector.load %arg4[%c0_6, %c0_7] : memref<128x128xbf16, #tpu.memory_space<vmem>>, vector<128x128xbf16>
    %cst_8 = arith.constant dense<0.000000e+00> : vector<2x128xf32>
    %11 = tpu.matmul %9, %10, %cst_8 {dimension_numbers = #tpu.dot_dimension_numbers<[1], [0], [0], [1], [0, 0, 1, 1], [], []>} : vector<2x128xbf16>, vector<128x128xbf16>, vector<2x128xf32> -> vector<2x128xf32>
    %c0_9 = arith.constant 0 : index
    %c0_10 = arith.constant 0 : index
    %12 = vector.load %arg5[%c0_9, %c0_10] : memref<1x128xf32, #tpu.memory_space<vmem>>, vector<1x128xf32>
    %13 = vector.broadcast %12 : vector<1x128xf32> to vector<2x128xf32>
    %14 = arith.addf %11, %13 : vector<2x128xf32>
    %c0_11 = arith.constant 0 : index
    %c0_12 = arith.constant 0 : index
    %15 = vector.load %arg11[%c0_11, %c0_12] : memref<2x128xf32, #tpu.memory_space<vmem>>, vector<2x128xf32>
    tpu.vector_store %arg11[%c0_11, %c0_12], %14 {strides = array<i32>} : memref<2x128xf32, #tpu.memory_space<vmem>>, vector<2x128xf32>,
    %16 = vector.extract_strided_slice %14 {offsets = [0, 0], sizes = [2, 32], strides = [1, 1]} : vector<2x128xf32> to vector<2x32xf32>
    %17 = arith.truncf %16 : vector<2x32xf32> to vector<2x32xbf16>
    %c0_13 = arith.constant 0 : index
    %c0_14 = arith.constant 0 : index
    %18 = vector.load %arg6[%c0_13, %c0_14] : memref<32x128xbf16, #tpu.memory_space<vmem>>, vector<32x128xbf16>
    %cst_15 = arith.constant dense<0.000000e+00> : vector<2x128xf32>
    %19 = tpu.matmul %17, %18, %cst_15 {dimension_numbers = #tpu.dot_dimension_numbers<[1], [0], [0], [1], [0, 0, 1, 1], [], []>} : vector<2x32xbf16>, vector<32x128xbf16>, vector<2x128xf32> -> vector<2x128xf32>
    %c0_16 = arith.constant 0 : index
    %c0_17 = arith.constant 0 : index
    %20 = vector.load %arg7[%c0_16, %c0_17] : memref<1x128xf32, #tpu.memory_space<vmem>>, vector<1x128xf32>
    %21 = vector.broadcast %20 : vector<1x128xf32> to vector<2x128xf32>
    %22 = arith.addf %19, %21 : vector<2x128xf32>
    %cst_18 = arith.constant 0.000000e+00 : f32
    %23 = vector.broadcast %cst_18 : f32 to vector<2x128xf32>
    %24 = arith.maximumf %22, %23 : vector<2x128xf32>
    %25 = arith.truncf %24 : vector<2x128xf32> to vector<2x128xbf16>
    %c0_19 = arith.constant 0 : index
    %c0_20 = arith.constant 0 : index
    %26 = vector.load %arg8[%c0_19, %c0_20] : memref<128x1024xbf16, #tpu.memory_space<vmem>>, vector<128x1024xbf16>
    %cst_21 = arith.constant dense<0.000000e+00> : vector<2x1024xf32>
    %27 = tpu.matmul %25, %26, %cst_21 {dimension_numbers = #tpu.dot_dimension_numbers<[1], [0], [0], [1], [0, 0, 1, 1], [], []>} : vector<2x128xbf16>, vector<128x1024xbf16>, vector<2x1024xf32> -> vector<2x1024xf32>
    %c0_22 = arith.constant 0 : index
    %c0_23 = arith.constant 0 : index
    %28 = vector.load %arg9[%c0_22, %c0_23] : memref<1x1024xf32, #tpu.memory_space<vmem>>, vector<1x1024xf32>
    %29 = vector.broadcast %28 : vector<1x1024xf32> to vector<2x1024xf32>
    %30 = arith.addf %27, %29 : vector<2x1024xf32>
    %31 = arith.negf %30 : vector<2x1024xf32>
    %32 = math.exp %31 : vector<2x1024xf32>
    %cst_24 = arith.constant 1.000000e+00 : f32
    %33 = vector.broadcast %cst_24 : f32 to vector<2x1024xf32>
    %34 = arith.addf %33, %32 : vector<2x1024xf32>
    %35 = arith.divf %33, %34 : vector<2x1024xf32>
    %c0_25 = arith.constant 0 : index
    %c0_26 = arith.constant 0 : index
    %36 = vector.load %arg10[%c0_25, %c0_26] : memref<2x1024xf32, #tpu.memory_space<vmem>>, vector<2x1024xf32>
    tpu.vector_store %arg10[%c0_25, %c0_26], %35 {strides = array<i32>} : memref<2x1024xf32, #tpu.memory_space<vmem>>, vector<2x1024xf32>,
    return
  }
  func.func @transform_0(%arg0: i32) -> (i32, i32) {
    %c0_i32 = arith.constant 0 : i32
    %c0_i32_0 = arith.constant 0 : i32
    return %arg0, %c0_i32 : i32, i32
  }
  func.func @transform_1(%arg0: i32) -> (i32, i32) {
    %c0_i32 = arith.constant 0 : i32
    %c0_i32_0 = arith.constant 0 : i32
    %c0_i32_1 = arith.constant 0 : i32
    return %c0_i32, %c0_i32_0 : i32, i32
  }
  func.func @transform_2(%arg0: i32) -> (i32, i32) {
    %c0_i32 = arith.constant 0 : i32
    %c0_i32_0 = arith.constant 0 : i32
    %c0_i32_1 = arith.constant 0 : i32
    return %c0_i32, %c0_i32_0 : i32, i32
  }
  func.func @transform_3(%arg0: i32) -> (i32, i32) {
    %c0_i32 = arith.constant 0 : i32
    %c0_i32_0 = arith.constant 0 : i32
    %c0_i32_1 = arith.constant 0 : i32
    return %c0_i32, %c0_i32_0 : i32, i32
  }
  func.func @transform_4(%arg0: i32) -> (i32, i32) {
    %c0_i32 = arith.constant 0 : i32
    %c0_i32_0 = arith.constant 0 : i32
    %c0_i32_1 = arith.constant 0 : i32
    return %c0_i32, %c0_i32_0 : i32, i32
  }
  func.func @transform_5(%arg0: i32) -> (i32, i32) {
    %c0_i32 = arith.constant 0 : i32
    %c0_i32_0 = arith.constant 0 : i32
    %c0_i32_1 = arith.constant 0 : i32
    return %c0_i32, %c0_i32_0 : i32, i32
  }
  func.func @transform_6(%arg0: i32) -> (i32, i32) {
    %c0_i32 = arith.constant 0 : i32
    %c0_i32_0 = arith.constant 0 : i32
    %c0_i32_1 = arith.constant 0 : i32
    return %c0_i32, %c0_i32_0 : i32, i32
  }
  func.func @transform_7(%arg0: i32) -> (i32, i32) {
    %c0_i32 = arith.constant 0 : i32
    %c0_i32_0 = arith.constant 0 : i32
    %c0_i32_1 = arith.constant 0 : i32
    return %c0_i32, %c0_i32_0 : i32, i32
  }
  func.func @transform_8(%arg0: i32) -> (i32, i32) {
    %c0_i32 = arith.constant 0 : i32
    %c0_i32_0 = arith.constant 0 : i32
    %c0_i32_1 = arith.constant 0 : i32
    return %c0_i32, %c0_i32_0 : i32, i32
  }
  func.func @transform_9(%arg0: i32) -> (i32, i32) {
    %c0_i32 = arith.constant 0 : i32
    %c0_i32_0 = arith.constant 0 : i32
    return %arg0, %c0_i32 : i32, i32
  }
  func.func @transform_10(%arg0: i32) -> (i32, i32) {
    %c0_i32 = arith.constant 0 : i32
    %c0_i32_0 = arith.constant 0 : i32
    return %arg0, %c0_i32 : i32, i32
  }
}

</mosaic_0001>

<llo_original>
// kernel: base_vae_forward.1
$region0: #{base_vae_forward.1}
  #allocation0 [shape = 'u32[]', space=smem, size = 0x4, offset = 0x4, fixed_abs, tag = 'smem constant byte address 0x4 - core index']
  #allocation1 [shape = 'u32[144,128]{1,0:T(1,128)}', space=vmem, size = 0x12000, scoped, tag = 'internal scratch']
  %s0 = inlined_call_operand.vmem [shape: f32[2,1024], index: 0, kind: input, shape index: {}]
  %s1 = inlined_call_operand.hbm [shape: bf16[1024,128], index: 1, kind: input, shape index: {}]
  %s2 = inlined_call_operand.vmem [shape: f32[1,128], index: 2, kind: input, shape index: {}]
  %s3 = inlined_call_operand.vmem [shape: bf16[128,128], index: 3, kind: input, shape index: {}]
  %s4 = inlined_call_operand.vmem [shape: f32[1,128], index: 4, kind: input, shape index: {}]
  %s5 = inlined_call_operand.vmem [shape: bf16[32,128], index: 5, kind: input, shape index: {}]
  %s6 = inlined_call_operand.vmem [shape: f32[1,128], index: 6, kind: input, shape index: {}]
  %s7 = inlined_call_operand.hbm [shape: bf16[128,1024], index: 7, kind: input, shape index: {}]
  %s8 = inlined_call_operand.vmem [shape: f32[1,1024], index: 8, kind: input, shape index: {}]
  %s9 = inlined_call_operand.vmem [shape: f32[2,1024], index: 9, kind: output, shape index: {0}]
  %s10 = inlined_call_operand.vmem [shape: f32[2,128], index: 10, kind: output, shape index: {1}]
  %11 = xla_tuple %s9, %s10
  %s12 = sld [smem:[#allocation0]]
  $region62: #{base_vae_forward.1} parent=0
    _
  %s14 = ssub.s32 1, %s12
  %s15 = scalar_select 0, %s14, %s12
  $region1: #{base_vae_forward.1} parent=0
    #allocation2 [shape = 'u8[262144]{0}', space=vmem, size = 0x40000, scoped, tag = 'input window, operand 1, single buffered']
    #allocation3 [shape = 's32[1]{0}', space=sflag, size = 0x4, scoped, tag = 'scoped memory for base_vae_forward.1']
    #allocation4 [shape = 'u8[262144]{0}', space=vmem, size = 0x40000, scoped, tag = 'input window, operand 7, single buffered']
    #allocation5 [shape = 's32[1]{0}', space=sflag, size = 0x4, scoped, tag = 'scoped memory for base_vae_forward.1']
    %16 = vsyncpa [#allocation3], 0
    %17 = vsyncpa [#allocation5], 0
    // Predicated region
    $region2: #{base_vae_forward.1} parent=1 // pred_check
      _
    $region3: #{base_vae_forward.1} parent=1 // pred_check_branch
      %19 = sbr.rel (0) target = $region5
    $region4: #{base_vae_forward.1} parent=1 // pred_region
      _
    $region5: #{base_vae_forward.1} parent=1 // pred_fallthru
      _
    // Predicated region
    $region6: #{base_vae_forward.1} parent=1 // pred_check
      _
    $region7: #{base_vae_forward.1} parent=1 // pred_check_branch
      %21 = sbr.rel (0) target = $region9
    $region8: #{base_vae_forward.1} parent=1 // pred_region
      %s23 = ssub.s32 8192, 8192
      %24 = vsyncadd [#allocation3], %s23
      %s25 = sshll.u32 [#allocation2], 4
      %s26 = int_to_ptr.vmem [resolvable:$true] %s25
      %31 = dma.hbm_to_vmem [thread:$0]  %s1, 8192, %s26, [#allocation3], 64, 64, 4
    $region9: #{base_vae_forward.1} parent=1 // pred_fallthru
      _
    // Predicated region
    $region10: #{base_vae_forward.1} parent=1 // pred_check
      _
    $region11: #{base_vae_forward.1} parent=1 // pred_check_branch
      %33 = sbr.rel (0) target = $region13
    $region12: #{base_vae_forward.1} parent=1 // pred_region
      _
    $region13: #{base_vae_forward.1} parent=1 // pred_fallthru
      _
    // Predicated region
    $region14: #{base_vae_forward.1} parent=1 // pred_check
      _
    $region15: #{base_vae_forward.1} parent=1 // pred_check_branch
      %35 = sbr.rel (0) target = $region17
    $region16: #{base_vae_forward.1} parent=1 // pred_region
      _
    $region17: #{base_vae_forward.1} parent=1 // pred_fallthru
      _
    // Predicated region
    $region18: #{base_vae_forward.1} parent=1 // pred_check
      _
    $region19: #{base_vae_forward.1} parent=1 // pred_check_branch
      %37 = sbr.rel (0) target = $region21
    $region20: #{base_vae_forward.1} parent=1 // pred_region
      _
    $region21: #{base_vae_forward.1} parent=1 // pred_fallthru
      _
    // Predicated region
    $region22: #{base_vae_forward.1} parent=1 // pred_check
      _
    $region23: #{base_vae_forward.1} parent=1 // pred_check_branch
      %39 = sbr.rel (0) target = $region25
    $region24: #{base_vae_forward.1} parent=1 // pred_region
      _
    $region25: #{base_vae_forward.1} parent=1 // pred_fallthru
      _
    // Predicated region
    $region26: #{base_vae_forward.1} parent=1 // pred_check
      _
    $region27: #{base_vae_forward.1} parent=1 // pred_check_branch
      %41 = sbr.rel (0) target = $region29
    $region28: #{base_vae_forward.1} parent=1 // pred_region
      _
    $region29: #{base_vae_forward.1} parent=1 // pred_fallthru
      _
    // Predicated region
    $region30: #{base_vae_forward.1} parent=1 // pred_check
      _
    $region31: #{base_vae_forward.1} parent=1 // pred_check_branch
      %43 = sbr.rel (0) target = $region33
    $region32: #{base_vae_forward.1} parent=1 // pred_region
      %s45 = ssub.s32 8192, 8192
      %46 = vsyncadd [#allocation5], %s45
      %s47 = sshll.u32 [#allocation4], 4
      %s48 = int_to_ptr.vmem [resolvable:$true] %s47
      %53 = dma.hbm_to_vmem [thread:$0]  %s7, 8192, %s48, [#allocation5], 512, 512, 32
    $region33: #{base_vae_forward.1} parent=1 // pred_fallthru
      _
    // Predicated region
    $region34: #{base_vae_forward.1} parent=1 // pred_check
      _
    $region35: #{base_vae_forward.1} parent=1 // pred_check_branch
      %55 = sbr.rel (0) target = $region37
    $region36: #{base_vae_forward.1} parent=1 // pred_region
      _
    $region37: #{base_vae_forward.1} parent=1 // pred_fallthru
      _
    // Predicated region
    $region38: #{base_vae_forward.1} parent=1 // pred_check
      _
    $region39: #{base_vae_forward.1} parent=1 // pred_check_branch
      %57 = sbr.rel (0) target = $region41
    $region40: #{base_vae_forward.1} parent=1 // pred_region
      %58 = dma.done [#allocation3], 8192
    $region41: #{base_vae_forward.1} parent=1 // pred_fallthru
      _
    // Predicated region
    $region42: #{base_vae_forward.1} parent=1 // pred_check
      _
    $region43: #{base_vae_forward.1} parent=1 // pred_check_branch
      %60 = sbr.rel (0) target = $region45
    $region44: #{base_vae_forward.1} parent=1 // pred_region
      %61 = dma.done [#allocation5], 8192
    $region45: #{base_vae_forward.1} parent=1 // pred_fallthru
      _
    %v63 = vld [vmem:[%s0] sm:$0xff]
    %v64 = vld [vmem:[%s0 + $0x8] sm:$0xff]
    %v67 = vcombine.high %v63, %v63
    %v69 = vunpack.c.l.s4 1983009808
    %v70 = vunpack.c.0.s8 %v69
    %v71 = vlaneseq
    %v72 = vshrl.u32 %v71, 7
    %v73 = vsub.s32 %v70, %v72
    %v74 = vrot.slane %v63, %v73
    %v76 = vunpack.c.l.s4 1983009808
    %v77 = vunpack.c.0.s8 %v76
    %v78 = vlaneseq
    %v79 = vshrl.u32 %v78, 7
    %v80 = vsub.s32 %v77, %v79
    %v81 = vrot.slane %v67, %v80
    %v82 = vcombine.high %v74, %v74
    %v83 = vcombine.high %v81, %v81
    %v84 = vcombine.high %v64, %v64
    %v86 = vunpack.c.l.s4 1983009808
    %v87 = vunpack.c.0.s8 %v86
    %v88 = vlaneseq
    %v89 = vshrl.u32 %v88, 7
    %v90 = vsub.s32 %v87, %v89
    %v91 = vrot.slane %v64, %v90
    %v93 = vunpack.c.l.s4 1983009808
    %v94 = vunpack.c.0.s8 %v93
    %v95 = vlaneseq
    %v96 = vshrl.u32 %v95, 7
    %v97 = vsub.s32 %v94, %v96
    %v98 = vrot.slane %v84, %v97
    %v99 = vcombine.high %v91, %v91
    %v100 = vcombine.high %v98, %v98
    %v109 = vpack.c.bf16 %v74, %v74
    %v110 = vpack.c.bf16 %v82, %v82
    %v111 = vpack.c.bf16 %v81, %v81
    %v112 = vpack.c.bf16 %v83, %v83
    %v113 = vpack.c.bf16 %v91, %v91
    %v114 = vpack.c.bf16 %v99, %v99
    %v115 = vpack.c.bf16 %v98, %v98
    %v116 = vpack.c.bf16 %v100, %v100
    %v117 = vld [vmem:[#allocation2] sm:$0xf]
    %v118 = vld [vmem:[#allocation2 + $0x4] sm:$0xf]
    %v119 = vld [vmem:[#allocation2 + $0x8] sm:$0xf]
    %v120 = vld [vmem:[#allocation2 + $0xc] sm:$0xf]
    %v121 = vld [vmem:[#allocation2 + $0x10] sm:$0xf]
    %v122 = vld [vmem:[#allocation2 + $0x14] sm:$0xf]
    %v123 = vld [vmem:[#allocation2 + $0x18] sm:$0xf]
    %v124 = vld [vmem:[#allocation2 + $0x1c] sm:$0xf]
    %v125 = vld [vmem:[#allocation2 + $0x20] sm:$0xf]
    %v126 = vld [vmem:[#allocation2 + $0x24] sm:$0xf]
    %v127 = vld [vmem:[#allocation2 + $0x28] sm:$0xf]
    %v128 = vld [vmem:[#allocation2 + $0x2c] sm:$0xf]
    %v129 = vld [vmem:[#allocation2 + $0x30] sm:$0xf]
    %v130 = vld [vmem:[#allocation2 + $0x34] sm:$0xf]
    %v131 = vld [vmem:[#allocation2 + $0x38] sm:$0xf]
    %v132 = vld [vmem:[#allocation2 + $0x3c] sm:$0xf]
    %v133 = vld [vmem:[#allocation2 + $0x40] sm:$0xf]
    %v134 = vld [vmem:[#allocation2 + $0x44] sm:$0xf]
    %v135 = vld [vmem:[#allocation2 + $0x48] sm:$0xf]
    %v136 = vld [vmem:[#allocation2 + $0x4c] sm:$0xf]
    %v137 = vld [vmem:[#allocation2 + $0x50] sm:$0xf]
    %v138 = vld [vmem:[#allocation2 + $0x54] sm:$0xf]
    %v139 = vld [vmem:[#allocation2 + $0x58] sm:$0xf]
    %v140 = vld [vmem:[#allocation2 + $0x5c] sm:$0xf]
    %v141 = vld [vmem:[#allocation2 + $0x60] sm:$0xf]
    %v142 = vld [vmem:[#allocation2 + $0x64] sm:$0xf]
    %v143 = vld [vmem:[#allocation2 + $0x68] sm:$0xf]
    %v144 = vld [vmem:[#allocation2 + $0x6c] sm:$0xf]
    %v145 = vld [vmem:[#allocation2 + $0x70] sm:$0xf]
    %v146 = vld [vmem:[#allocation2 + $0x74] sm:$0xf]
    %v147 = vld [vmem:[#allocation2 + $0x78] sm:$0xf]
    %v148 = vld [vmem:[#allocation2 + $0x7c] sm:$0xf]
    %v149 = vld [vmem:[#allocation2 + $0x80] sm:$0xf]
    %v150 = vld [vmem:[#allocation2 + $0x84] sm:$0xf]
    %v151 = vld [vmem:[#allocation2 + $0x88] sm:$0xf]
    %v152 = vld [vmem:[#allocation2 + $0x8c] sm:$0xf]
    %v153 = vld [vmem:[#allocation2 + $0x90] sm:$0xf]
    %v154 = vld [vmem:[#allocation2 + $0x94] sm:$0xf]
    %v155 = vld [vmem:[#allocation2 + $0x98] sm:$0xf]
    %v156 = vld [vmem:[#allocation2 + $0x9c] sm:$0xf]
    %v157 = vld [vmem:[#allocation2 + $0xa0] sm:$0xf]
    %v158 = vld [vmem:[#allocation2 + $0xa4] sm:$0xf]
    %v159 = vld [vmem:[#allocation2 + $0xa8] sm:$0xf]
    %v160 = vld [vmem:[#allocation2 + $0xac] sm:$0xf]
    %v161 = vld [vmem:[#allocation2 + $0xb0] sm:$0xf]
    %v162 = vld [vmem:[#allocation2 + $0xb4] sm:$0xf]
    %v163 = vld [vmem:[#allocation2 + $0xb8] sm:$0xf]
    %v164 = vld [vmem:[#allocation2 + $0xbc] sm:$0xf]
    %v165 = vld [vmem:[#allocation2 + $0xc0] sm:$0xf]
    %v166 = vld [vmem:[#allocation2 + $0xc4] sm:$0xf]
    %v167 = vld [vmem:[#allocation2 + $0xc8] sm:$0xf]
    %v168 = vld [vmem:[#allocation2 + $0xcc] sm:$0xf]
    %v169 = vld [vmem:[#allocation2 + $0xd0] sm:$0xf]
    %v170 = vld [vmem:[#allocation2 + $0xd4] sm:$0xf]
    %v171 = vld [vmem:[#allocation2 + $0xd8] sm:$0xf]
    %v172 = vld [vmem:[#allocation2 + $0xdc] sm:$0xf]
    %v173 = vld [vmem:[#allocation2 + $0xe0] sm:$0xf]
    %v174 = vld [vmem:[#allocation2 + $0xe4] sm:$0xf]
    %v175 = vld [vmem:[#allocation2 + $0xe8] sm:$0xf]
    %v176 = vld [vmem:[#allocation2 + $0xec] sm:$0xf]
    %v177 = vld [vmem:[#allocation2 + $0xf0] sm:$0xf]
    %v178 = vld [vmem:[#allocation2 + $0xf4] sm:$0xf]
    %v179 = vld [vmem:[#allocation2 + $0xf8] sm:$0xf]
    %v180 = vld [vmem:[#allocation2 + $0xfc] sm:$0xf]
    %v181 = vld [vmem:[#allocation2 + $0x100] sm:$0xf]
    %v182 = vld [vmem:[#allocation2 + $0x104] sm:$0xf]
    %v183 = vld [vmem:[#allocation2 + $0x108] sm:$0xf]
    %v184 = vld [vmem:[#allocation2 + $0x10c] sm:$0xf]
    %v185 = vld [vmem:[#allocation2 + $0x110] sm:$0xf]
    %v186 = vld [vmem:[#allocation2 + $0x114] sm:$0xf]
    %v187 = vld [vmem:[#allocation2 + $0x118] sm:$0xf]
    %v188 = vld [vmem:[#allocation2 + $0x11c] sm:$0xf]
    %v189 = vld [vmem:[#allocation2 + $0x120] sm:$0xf]
    %v190 = vld [vmem:[#allocation2 + $0x124] sm:$0xf]
    %v191 = vld [vmem:[#allocation2 + $0x128] sm:$0xf]
    %v192 = vld [vmem:[#allocation2 + $0x12c] sm:$0xf]
    %v193 = vld [vmem:[#allocation2 + $0x130] sm:$0xf]
    %v194 = vld [vmem:[#allocation2 + $0x134] sm:$0xf]
    %v195 = vld [vmem:[#allocation2 + $0x138] sm:$0xf]
    %v196 = vld [vmem:[#allocation2 + $0x13c] sm:$0xf]
    %v197 = vld [vmem:[#allocation2 + $0x140] sm:$0xf]
    %v198 = vld [vmem:[#allocation2 + $0x144] sm:$0xf]
    %v199 = vld [vmem:[#allocation2 + $0x148] sm:$0xf]
    %v200 = vld [vmem:[#allocation2 + $0x14c] sm:$0xf]
    %v201 = vld [vmem:[#allocation2 + $0x150] sm:$0xf]
    %v202 = vld [vmem:[#allocation2 + $0x154] sm:$0xf]
    %v203 = vld [vmem:[#allocation2 + $0x158] sm:$0xf]
    %v204 = vld [vmem:[#allocation2 + $0x15c] sm:$0xf]
    %v205 = vld [vmem:[#allocation2 + $0x160] sm:$0xf]
    %v206 = vld [vmem:[#allocation2 + $0x164] sm:$0xf]
    %v207 = vld [vmem:[#allocation2 + $0x168] sm:$0xf]
    %v208 = vld [vmem:[#allocation2 + $0x16c] sm:$0xf]
    %v209 = vld [vmem:[#allocation2 + $0x170] sm:$0xf]
    %v210 = vld [vmem:[#allocation2 + $0x174] sm:$0xf]
    %v211 = vld [vmem:[#allocation2 + $0x178] sm:$0xf]
    %v212 = vld [vmem:[#allocation2 + $0x17c] sm:$0xf]
    %v213 = vld [vmem:[#allocation2 + $0x180] sm:$0xf]
    %v214 = vld [vmem:[#allocation2 + $0x184] sm:$0xf]
    %v215 = vld [vmem:[#allocation2 + $0x188] sm:$0xf]
    %v216 = vld [vmem:[#allocation2 + $0x18c] sm:$0xf]
    %v217 = vld [vmem:[#allocation2 + $0x190] sm:$0xf]
    %v218 = vld [vmem:[#allocation2 + $0x194] sm:$0xf]
    %v219 = vld [vmem:[#allocation2 + $0x198] sm:$0xf]
    %v220 = vld [vmem:[#allocation2 + $0x19c] sm:$0xf]
    %v221 = vld [vmem:[#allocation2 + $0x1a0] sm:$0xf]
    %v222 = vld [vmem:[#allocation2 + $0x1a4] sm:$0xf]
    %v223 = vld [vmem:[#allocation2 + $0x1a8] sm:$0xf]
    %v224 = vld [vmem:[#allocation2 + $0x1ac] sm:$0xf]
    %v225 = vld [vmem:[#allocation2 + $0x1b0] sm:$0xf]
    %v226 = vld [vmem:[#allocation2 + $0x1b4] sm:$0xf]
    %v227 = vld [vmem:[#allocation2 + $0x1b8] sm:$0xf]
    %v228 = vld [vmem:[#allocation2 + $0x1bc] sm:$0xf]
    %v229 = vld [vmem:[#allocation2 + $0x1c0] sm:$0xf]
    %v230 = vld [vmem:[#allocation2 + $0x1c4] sm:$0xf]
    %v231 = vld [vmem:[#allocation2 + $0x1c8] sm:$0xf]
    %v232 = vld [vmem:[#allocation2 + $0x1cc] sm:$0xf]
    %v233 = vld [vmem:[#allocation2 + $0x1d0] sm:$0xf]
    %v234 = vld [vmem:[#allocation2 + $0x1d4] sm:$0xf]
    %v235 = vld [vmem:[#allocation2 + $0x1d8] sm:$0xf]
    %v236 = vld [vmem:[#allocation2 + $0x1dc] sm:$0xf]
    %v237 = vld [vmem:[#allocation2 + $0x1e0] sm:$0xf]
    %v238 = vld [vmem:[#allocation2 + $0x1e4] sm:$0xf]
    %v239 = vld [vmem:[#allocation2 + $0x1e8] sm:$0xf]
    %v240 = vld [vmem:[#allocation2 + $0x1ec] sm:$0xf]
    %v241 = vld [vmem:[#allocation2 + $0x1f0] sm:$0xf]
    %v242 = vld [vmem:[#allocation2 + $0x1f4] sm:$0xf]
    %v243 = vld [vmem:[#allocation2 + $0x1f8] sm:$0xf]
    %v244 = vld [vmem:[#allocation2 + $0x1fc] sm:$0xf]
    %v245 = vld [vmem:[%s2] sm:$0x1]
    %v247 = vlaneseq
    %v248 = vshrl.u32 %v247, 7
    %v249 = vsub.s32 0, %v248
    %v250 = vrot.slane %v245, %v249
    %v380 = vunpack.c.l.b16 %v117
    %v381 = vunpack.c.l.b16 %v118
    %v382 = vunpack.c.l.b16 %v119
    %v383 = vunpack.c.l.b16 %v120
    %v384 = vunpack.c.l.b16 %v121
    %v385 = vunpack.c.l.b16 %v122
    %v386 = vunpack.c.l.b16 %v123
    %v387 = vunpack.c.l.b16 %v124
    %v388 = vunpack.c.l.b16 %v125
    %v389 = vunpack.c.l.b16 %v126
    %v390 = vunpack.c.l.b16 %v127
    %v391 = vunpack.c.l.b16 %v128
    %v392 = vunpack.c.l.b16 %v129
    %v393 = vunpack.c.l.b16 %v130
    %v394 = vunpack.c.l.b16 %v131
    %v395 = vunpack.c.l.b16 %v132
    %v396 = vunpack.c.l.b16 %v133
    %v397 = vunpack.c.l.b16 %v134
    %v398 = vunpack.c.l.b16 %v135
    %v399 = vunpack.c.l.b16 %v136
    %v400 = vunpack.c.l.b16 %v137
    %v401 = vunpack.c.l.b16 %v138
    %v402 = vunpack.c.l.b16 %v139
    %v403 = vunpack.c.l.b16 %v140
    %v404 = vunpack.c.l.b16 %v141
    %v405 = vunpack.c.l.b16 %v142
    %v406 = vunpack.c.l.b16 %v143
    %v407 = vunpack.c.l.b16 %v144
    %v408 = vunpack.c.l.b16 %v145
    %v409 = vunpack.c.l.b16 %v146
    %v410 = vunpack.c.l.b16 %v147
    %v411 = vunpack.c.l.b16 %v148
    %v412 = vunpack.c.l.b16 %v149
    %v413 = vunpack.c.l.b16 %v150
    %v414 = vunpack.c.l.b16 %v151
    %v415 = vunpack.c.l.b16 %v152
    %v416 = vunpack.c.l.b16 %v153
    %v417 = vunpack.c.l.b16 %v154
    %v418 = vunpack.c.l.b16 %v155
    %v419 = vunpack.c.l.b16 %v156
    %v420 = vunpack.c.l.b16 %v157
    %v421 = vunpack.c.l.b16 %v158
    %v422 = vunpack.c.l.b16 %v159
    %v423 = vunpack.c.l.b16 %v160
    %v424 = vunpack.c.l.b16 %v161
    %v425 = vunpack.c.l.b16 %v162
    %v426 = vunpack.c.l.b16 %v163
    %v427 = vunpack.c.l.b16 %v164
    %v428 = vunpack.c.l.b16 %v165
    %v429 = vunpack.c.l.b16 %v166
    %v430 = vunpack.c.l.b16 %v167
    %v431 = vunpack.c.l.b16 %v168
    %v432 = vunpack.c.l.b16 %v169
    %v433 = vunpack.c.l.b16 %v170
    %v434 = vunpack.c.l.b16 %v171
    %v435 = vunpack.c.l.b16 %v172
    %v436 = vunpack.c.l.b16 %v173
    %v437 = vunpack.c.l.b16 %v174
    %v438 = vunpack.c.l.b16 %v175
    %v439 = vunpack.c.l.b16 %v176
    %v440 = vunpack.c.l.b16 %v177
    %v441 = vunpack.c.l.b16 %v178
    %v442 = vunpack.c.l.b16 %v179
    %v443 = vunpack.c.l.b16 %v180
    %v444 = vunpack.c.l.b16 %v181
    %v445 = vunpack.c.l.b16 %v182
    %v446 = vunpack.c.l.b16 %v183
    %v447 = vunpack.c.l.b16 %v184
    %v448 = vunpack.c.l.b16 %v185
    %v449 = vunpack.c.l.b16 %v186
    %v450 = vunpack.c.l.b16 %v187
    %v451 = vunpack.c.l.b16 %v188
    %v452 = vunpack.c.l.b16 %v189
    %v453 = vunpack.c.l.b16 %v190
    %v454 = vunpack.c.l.b16 %v191
    %v455 = vunpack.c.l.b16 %v192
    %v456 = vunpack.c.l.b16 %v193
    %v457 = vunpack.c.l.b16 %v194
    %v458 = vunpack.c.l.b16 %v195
    %v459 = vunpack.c.l.b16 %v196
    %v460 = vunpack.c.l.b16 %v197
    %v461 = vunpack.c.l.b16 %v198
    %v462 = vunpack.c.l.b16 %v199
    %v463 = vunpack.c.l.b16 %v200
    %v464 = vunpack.c.l.b16 %v201
    %v465 = vunpack.c.l.b16 %v202
    %v466 = vunpack.c.l.b16 %v203
    %v467 = vunpack.c.l.b16 %v204
    %v468 = vunpack.c.l.b16 %v205
    %v469 = vunpack.c.l.b16 %v206
    %v470 = vunpack.c.l.b16 %v207
    %v471 = vunpack.c.l.b16 %v208
    %v472 = vunpack.c.l.b16 %v209
    %v473 = vunpack.c.l.b16 %v210
    %v474 = vunpack.c.l.b16 %v211
    %v475 = vunpack.c.l.b16 %v212
    %v476 = vunpack.c.l.b16 %v213
    %v477 = vunpack.c.l.b16 %v214
    %v478 = vunpack.c.l.b16 %v215
    %v479 = vunpack.c.l.b16 %v216
    %v480 = vunpack.c.l.b16 %v217
    %v481 = vunpack.c.l.b16 %v218
    %v482 = vunpack.c.l.b16 %v219
    %v483 = vunpack.c.l.b16 %v220
    %v484 = vunpack.c.l.b16 %v221
    %v485 = vunpack.c.l.b16 %v222
    %v486 = vunpack.c.l.b16 %v223
    %v487 = vunpack.c.l.b16 %v224
    %v488 = vunpack.c.l.b16 %v225
    %v489 = vunpack.c.l.b16 %v226
    %v490 = vunpack.c.l.b16 %v227
    %v491 = vunpack.c.l.b16 %v228
    %v492 = vunpack.c.l.b16 %v229
    %v493 = vunpack.c.l.b16 %v230
    %v494 = vunpack.c.l.b16 %v231
    %v495 = vunpack.c.l.b16 %v232
    %v496 = vunpack.c.l.b16 %v233
    %v497 = vunpack.c.l.b16 %v234
    %v498 = vunpack.c.l.b16 %v235
    %v499 = vunpack.c.l.b16 %v236
    %v500 = vunpack.c.l.b16 %v237
    %v501 = vunpack.c.l.b16 %v238
    %v502 = vunpack.c.l.b16 %v239
    %v503 = vunpack.c.l.b16 %v240
    %v504 = vunpack.c.l.b16 %v241
    %v505 = vunpack.c.l.b16 %v242
    %v506 = vunpack.c.l.b16 %v243
    %v507 = vunpack.c.l.b16 %v244
    %v508 = vpack.c.b16 %v381, %v380
    %v509 = vpack.c.b16 %v383, %v382
    %v510 = vpack.c.b16 %v385, %v384
    %v511 = vpack.c.b16 %v387, %v386
    %v512 = vpack.c.b16 %v389, %v388
    %v513 = vpack.c.b16 %v391, %v390
    %v514 = vpack.c.b16 %v393, %v392
    %v515 = vpack.c.b16 %v395, %v394
    %v516 = vpack.c.b16 %v397, %v396
    %v517 = vpack.c.b16 %v399, %v398
    %v518 = vpack.c.b16 %v401, %v400
    %v519 = vpack.c.b16 %v403, %v402
    %v520 = vpack.c.b16 %v405, %v404
    %v521 = vpack.c.b16 %v407, %v406
    %v522 = vpack.c.b16 %v409, %v408
    %v523 = vpack.c.b16 %v411, %v410
    %v524 = vpack.c.b16 %v413, %v412
    %v525 = vpack.c.b16 %v415, %v414
    %v526 = vpack.c.b16 %v417, %v416
    %v527 = vpack.c.b16 %v419, %v418
    %v528 = vpack.c.b16 %v421, %v420
    %v529 = vpack.c.b16 %v423, %v422
    %v530 = vpack.c.b16 %v425, %v424
    %v531 = vpack.c.b16 %v427, %v426
    %v532 = vpack.c.b16 %v429, %v428
    %v533 = vpack.c.b16 %v431, %v430
    %v534 = vpack.c.b16 %v433, %v432
    %v535 = vpack.c.b16 %v435, %v434
    %v536 = vpack.c.b16 %v437, %v436
    %v537 = vpack.c.b16 %v439, %v438
    %v538 = vpack.c.b16 %v441, %v440
    %v539 = vpack.c.b16 %v443, %v442
    %v540 = vpack.c.b16 %v445, %v444
    %v541 = vpack.c.b16 %v447, %v446
    %v542 = vpack.c.b16 %v449, %v448
    %v543 = vpack.c.b16 %v451, %v450
    %v544 = vpack.c.b16 %v453, %v452
    %v545 = vpack.c.b16 %v455, %v454
    %v546 = vpack.c.b16 %v457, %v456
    %v547 = vpack.c.b16 %v459, %v458
    %v548 = vpack.c.b16 %v461, %v460
    %v549 = vpack.c.b16 %v463, %v462
    %v550 = vpack.c.b16 %v465, %v464
    %v551 = vpack.c.b16 %v467, %v466
    %v552 = vpack.c.b16 %v469, %v468
    %v553 = vpack.c.b16 %v471, %v470
    %v554 = vpack.c.b16 %v473, %v472
    %v555 = vpack.c.b16 %v475, %v474
    %v556 = vpack.c.b16 %v477, %v476
    %v557 = vpack.c.b16 %v479, %v478
    %v558 = vpack.c.b16 %v481, %v480
    %v559 = vpack.c.b16 %v483, %v482
    %v560 = vpack.c.b16 %v485, %v484
    %v561 = vpack.c.b16 %v487, %v486
    %v562 = vpack.c.b16 %v489, %v488
    %v563 = vpack.c.b16 %v491, %v490
    %v564 = vpack.c.b16 %v493, %v492
    %v565 = vpack.c.b16 %v495, %v494
    %v566 = vpack.c.b16 %v497, %v496
    %v567 = vpack.c.b16 %v499, %v498
    %v568 = vpack.c.b16 %v501, %v500
    %v569 = vpack.c.b16 %v503, %v502
    %v570 = vpack.c.b16 %v505, %v504
    %v571 = vpack.c.b16 %v507, %v506
    %636 = vmatprep.subr.bf16.mxu0 0
    %637 = vmatpush1.bf16.msra.mxu0 %v508
    %638 = vmatprep.subr.bf16.mxu0 0
    %639 = vmatpush1.bf16.msra.mxu0 %v509
    %640 = vmatprep.subr.bf16.mxu0 0
    %641 = vmatpush1.bf16.msra.mxu0 %v510
    %642 = vmatprep.subr.bf16.mxu0 0
    %643 = vmatpush1.bf16.msra.mxu0 %v511
    %644 = vmatprep.subr.bf16.mxu0 0
    %645 = vmatpush1.bf16.msra.mxu0 %v512
    %646 = vmatprep.subr.bf16.mxu0 0
    %647 = vmatpush1.bf16.msra.mxu0 %v513
    %648 = vmatprep.subr.bf16.mxu0 0
    %649 = vmatpush1.bf16.msra.mxu0 %v514
    %650 = vmatprep.subr.bf16.mxu0 0
    %651 = vmatpush1.bf16.msra.mxu0 %v515
    %652 = vmatprep.subr.bf16.mxu0 0
    %653 = vmatpush1.bf16.msra.mxu0 %v516
    %654 = vmatprep.subr.bf16.mxu0 0
    %655 = vmatpush1.bf16.msra.mxu0 %v517
    %656 = vmatprep.subr.bf16.mxu0 0
    %657 = vmatpush1.bf16.msra.mxu0 %v518
    %658 = vmatprep.subr.bf16.mxu0 0
    %659 = vmatpush1.bf16.msra.mxu0 %v519
    %660 = vmatprep.subr.bf16.mxu0 0
    %661 = vmatpush1.bf16.msra.mxu0 %v520
    %662 = vmatprep.subr.bf16.mxu0 0
    %663 = vmatpush1.bf16.msra.mxu0 %v521
    %664 = vmatprep.subr.bf16.mxu0 0
    %665 = vmatpush1.bf16.msra.mxu0 %v522
    %666 = vmatprep.subr.bf16.mxu0 0
    %667 = vmatpush1.bf16.msra.mxu0 %v523
    %668 = vmatprep.mubr.bf16.mxu0 %v110
    %669 = vmatmul.mubr.bf16.gmra.mrb[0].mxu0 %v109
    %v670 = vpop.f32.mrb[0].mxu0
    %v671 = vadd.f32 %v250, %v670
    %v672 = vpop.f32.mrb[0].mxu0
    %v673 = vpop.f32.mrb[0].mxu0
    %v674 = vpop.f32.mrb[0].mxu0
    %675 = vdwg.mxu0
    %676 = vmatprep.subr.bf16.mxu0 0
    %677 = vmatpush1.bf16.msra.mxu0 %v524
    %678 = vmatprep.subr.bf16.mxu0 0
    %679 = vmatpush1.bf16.msra.mxu0 %v525
    %680 = vmatprep.subr.bf16.mxu0 0
    %681 = vmatpush1.bf16.msra.mxu0 %v526
    %682 = vmatprep.subr.bf16.mxu0 0
    %683 = vmatpush1.bf16.msra.mxu0 %v527
    %684 = vmatprep.subr.bf16.mxu0 0
    %685 = vmatpush1.bf16.msra.mxu0 %v528
    %686 = vmatprep.subr.bf16.mxu0 0
    %687 = vmatpush1.bf16.msra.mxu0 %v529
    %688 = vmatprep.subr.bf16.mxu0 0
    %689 = vmatpush1.bf16.msra.mxu0 %v530
    %690 = vmatprep.subr.bf16.mxu0 0
    %691 = vmatpush1.bf16.msra.mxu0 %v531
    %692 = vmatprep.subr.bf16.mxu0 0
    %693 = vmatpush1.bf16.msra.mxu0 %v532
    %694 = vmatprep.subr.bf16.mxu0 0
    %695 = vmatpush1.bf16.msra.mxu0 %v533
    %696 = vmatprep.subr.bf16.mxu0 0
    %697 = vmatpush1.bf16.msra.mxu0 %v534
    %698 = vmatprep.subr.bf16.mxu0 0
    %699 = vmatpush1.bf16.msra.mxu0 %v535
    %700 = vmatprep.subr.bf16.mxu0 0
    %701 = vmatpush1.bf16.msra.mxu0 %v536
    %702 = vmatprep.subr.bf16.mxu0 0
    %703 = vmatpush1.bf16.msra.mxu0 %v537
    %704 = vmatprep.subr.bf16.mxu0 0
    %705 = vmatpush1.bf16.msra.mxu0 %v538
    %706 = vmatprep.subr.bf16.mxu0 0
    %707 = vmatpush1.bf16.msra.mxu0 %v539
    %708 = vmatprep.mubr.bf16.mxu0 %v112
    %709 = vmatmul.mubr.bf16.gmra.mrb[0].mxu0 %v111
    %v710 = vpop.f32.mrb[0].mxu0
    %v711 = vadd.f32 %v671, %v710
    %v712 = vpop.f32.mrb[0].mxu0
    %v713 = vpop.f32.mrb[0].mxu0
    %v714 = vpop.f32.mrb[0].mxu0
    %715 = vdwg.mxu0
    %716 = vmatprep.subr.bf16.mxu0 0
    %717 = vmatpush1.bf16.msra.mxu0 %v540
    %718 = vmatprep.subr.bf16.mxu0 0
    %719 = vmatpush1.bf16.msra.mxu0 %v541
    %720 = vmatprep.subr.bf16.mxu0 0
    %721 = vmatpush1.bf16.msra.mxu0 %v542
    %722 = vmatprep.subr.bf16.mxu0 0
    %723 = vmatpush1.bf16.msra.mxu0 %v543
    %724 = vmatprep.subr.bf16.mxu0 0
    %725 = vmatpush1.bf16.msra.mxu0 %v544
    %726 = vmatprep.subr.bf16.mxu0 0
    %727 = vmatpush1.bf16.msra.mxu0 %v545
    %728 = vmatprep.subr.bf16.mxu0 0
    %729 = vmatpush1.bf16.msra.mxu0 %v546
    %730 = vmatprep.subr.bf16.mxu0 0
    %731 = vmatpush1.bf16.msra.mxu0 %v547
    %732 = vmatprep.subr.bf16.mxu0 0
    %733 = vmatpush1.bf16.msra.mxu0 %v548
    %734 = vmatprep.subr.bf16.mxu0 0
    %735 = vmatpush1.bf16.msra.mxu0 %v549
    %736 = vmatprep.subr.bf16.mxu0 0
    %737 = vmatpush1.bf16.msra.mxu0 %v550
    %738 = vmatprep.subr.bf16.mxu0 0
    %739 = vmatpush1.bf16.msra.mxu0 %v551
    %740 = vmatprep.subr.bf16.mxu0 0
    %741 = vmatpush1.bf16.msra.mxu0 %v552
    %742 = vmatprep.subr.bf16.mxu0 0
    %743 = vmatpush1.bf16.msra.mxu0 %v553
    %744 = vmatprep.subr.bf16.mxu0 0
    %745 = vmatpush1.bf16.msra.mxu0 %v554
    %746 = vmatprep.subr.bf16.mxu0 0
    %747 = vmatpush1.bf16.msra.mxu0 %v555
    %748 = vmatprep.mubr.bf16.mxu0 %v114
    %749 = vmatmul.mubr.bf16.gmra.mrb[0].mxu0 %v113
    %v750 = vpop.f32.mrb[0].mxu0
    %v751 = vadd.f32 %v711, %v750
    %v752 = vpop.f32.mrb[0].mxu0
    %v753 = vpop.f32.mrb[0].mxu0
    %v754 = vpop.f32.mrb[0].mxu0
    %755 = vdwg.mxu0
    %756 = vmatprep.subr.bf16.mxu0 0
    %757 = vmatpush1.bf16.msra.mxu0 %v556
    %758 = vmatprep.subr.bf16.mxu0 0
    %759 = vmatpush1.bf16.msra.mxu0 %v557
    %760 = vmatprep.subr.bf16.mxu0 0
    %761 = vmatpush1.bf16.msra.mxu0 %v558
    %762 = vmatprep.subr.bf16.mxu0 0
    %763 = vmatpush1.bf16.msra.mxu0 %v559
    %764 = vmatprep.subr.bf16.mxu0 0
    %765 = vmatpush1.bf16.msra.mxu0 %v560
    %766 = vmatprep.subr.bf16.mxu0 0
    %767 = vmatpush1.bf16.msra.mxu0 %v561
    %768 = vmatprep.subr.bf16.mxu0 0
    %769 = vmatpush1.bf16.msra.mxu0 %v562
    %770 = vmatprep.subr.bf16.mxu0 0
    %771 = vmatpush1.bf16.msra.mxu0 %v563
    %772 = vmatprep.subr.bf16.mxu0 0
    %773 = vmatpush1.bf16.msra.mxu0 %v564
    %774 = vmatprep.subr.bf16.mxu0 0
    %775 = vmatpush1.bf16.msra.mxu0 %v565
    %776 = vmatprep.subr.bf16.mxu0 0
    %777 = vmatpush1.bf16.msra.mxu0 %v566
    %778 = vmatprep.subr.bf16.mxu0 0
    %779 = vmatpush1.bf16.msra.mxu0 %v567
    %780 = vmatprep.subr.bf16.mxu0 0
    %781 = vmatpush1.bf16.msra.mxu0 %v568
    %782 = vmatprep.subr.bf16.mxu0 0
    %783 = vmatpush1.bf16.msra.mxu0 %v569
    %784 = vmatprep.subr.bf16.mxu0 0
    %785 = vmatpush1.bf16.msra.mxu0 %v570
    %786 = vmatprep.subr.bf16.mxu0 0
    %787 = vmatpush1.bf16.msra.mxu0 %v571
    %788 = vmatprep.mubr.bf16.mxu0 %v116
    %789 = vmatmul.mubr.bf16.gmra.mrb[0].mxu0 %v115
    %v790 = vpop.f32.mrb[0].mxu0
    %v791 = vadd.f32 %v751, %v790
    %v792 = vpop.f32.mrb[0].mxu0
    %v793 = vpop.f32.mrb[0].mxu0
    %v794 = vpop.f32.mrb[0].mxu0
    %795 = vdwg.mxu0
    %v796 = vmax.f32 %v791, 0.0
    %v797 = vpack.c.bf16 %v796, %v796
    %v798 = vld [vmem:[%s3] sm:$0xf]
    %v799 = vld [vmem:[%s3 + $0x4] sm:$0xf]
    %v800 = vld [vmem:[%s3 + $0x8] sm:$0xf]
    %v801 = vld [vmem:[%s3 + $0xc] sm:$0xf]
    %v802 = vld [vmem:[%s3 + $0x10] sm:$0xf]
    %v803 = vld [vmem:[%s3 + $0x14] sm:$0xf]
    %v804 = vld [vmem:[%s3 + $0x18] sm:$0xf]
    %v805 = vld [vmem:[%s3 + $0x1c] sm:$0xf]
    %v806 = vld [vmem:[%s3 + $0x20] sm:$0xf]
    %v807 = vld [vmem:[%s3 + $0x24] sm:$0xf]
    %v808 = vld [vmem:[%s3 + $0x28] sm:$0xf]
    %v809 = vld [vmem:[%s3 + $0x2c] sm:$0xf]
    %v810 = vld [vmem:[%s3 + $0x30] sm:$0xf]
    %v811 = vld [vmem:[%s3 + $0x34] sm:$0xf]
    %v812 = vld [vmem:[%s3 + $0x38] sm:$0xf]
    %v813 = vld [vmem:[%s3 + $0x3c] sm:$0xf]
    %v814 = vld [vmem:[%s4] sm:$0x1]
    %v816 = vlaneseq
    %v817 = vshrl.u32 %v816, 7
    %v818 = vsub.s32 0, %v817
    %v819 = vrot.slane %v814, %v818
    %v837 = vunpack.c.l.b16 %v798
    %v838 = vunpack.c.l.b16 %v799
    %v839 = vunpack.c.l.b16 %v800
    %v840 = vunpack.c.l.b16 %v801
    %v841 = vunpack.c.l.b16 %v802
    %v842 = vunpack.c.l.b16 %v803
    %v843 = vunpack.c.l.b16 %v804
    %v844 = vunpack.c.l.b16 %v805
    %v845 = vunpack.c.l.b16 %v806
    %v846 = vunpack.c.l.b16 %v807
    %v847 = vunpack.c.l.b16 %v808
    %v848 = vunpack.c.l.b16 %v809
    %v849 = vunpack.c.l.b16 %v810
    %v850 = vunpack.c.l.b16 %v811
    %v851 = vunpack.c.l.b16 %v812
    %v852 = vunpack.c.l.b16 %v813
    %v853 = vpack.c.b16 %v838, %v837
    %v854 = vpack.c.b16 %v840, %v839
    %v855 = vpack.c.b16 %v842, %v841
    %v856 = vpack.c.b16 %v844, %v843
    %v857 = vpack.c.b16 %v846, %v845
    %v858 = vpack.c.b16 %v848, %v847
    %v859 = vpack.c.b16 %v850, %v849
    %v860 = vpack.c.b16 %v852, %v851
    %869 = vmatprep.subr.bf16.mxu0 0
    %870 = vmatpush1.bf16.msra.mxu0 %v853
    %871 = vmatprep.subr.bf16.mxu0 0
    %872 = vmatpush1.bf16.msra.mxu0 %v854
    %873 = vmatprep.subr.bf16.mxu0 0
    %874 = vmatpush1.bf16.msra.mxu0 %v855
    %875 = vmatprep.subr.bf16.mxu0 0
    %876 = vmatpush1.bf16.msra.mxu0 %v856
    %877 = vmatprep.subr.bf16.mxu0 0
    %878 = vmatpush1.bf16.msra.mxu0 %v857
    %879 = vmatprep.subr.bf16.mxu0 0
    %880 = vmatpush1.bf16.msra.mxu0 %v858
    %881 = vmatprep.subr.bf16.mxu0 0
    %882 = vmatpush1.bf16.msra.mxu0 %v859
    %883 = vmatprep.subr.bf16.mxu0 0
    %884 = vmatpush1.bf16.msra.mxu0 %v860
    %885 = vmatprep.subr.bf16.mxu0 0
    %886 = vmatpush1.bf16.msra.mxu0 0
    %887 = vmatprep.subr.bf16.mxu0 0
    %888 = vmatpush1.bf16.msra.mxu0 0
    %889 = vmatprep.subr.bf16.mxu0 0
    %890 = vmatpush1.bf16.msra.mxu0 0
    %891 = vmatprep.subr.bf16.mxu0 0
    %892 = vmatpush1.bf16.msra.mxu0 0
    %893 = vmatprep.subr.bf16.mxu0 0
    %894 = vmatpush1.bf16.msra.mxu0 0
    %895 = vmatprep.subr.bf16.mxu0 0
    %896 = vmatpush1.bf16.msra.mxu0 0
    %897 = vmatprep.subr.bf16.mxu0 0
    %898 = vmatpush1.bf16.msra.mxu0 0
    %899 = vmatprep.subr.bf16.mxu0 0
    %900 = vmatpush1.bf16.msra.mxu0 0
    %901 = vmatprep.mubr.bf16.mxu0 0
    %902 = vmatmul.mubr.bf16.gmra.mrb[0].mxu0 %v797
    %v903 = vpop.f32.mrb[0].mxu0
    %v904 = vadd.f32 %v819, %v903
    %v905 = vpop.f32.mrb[0].mxu0
    %v906 = vpop.f32.mrb[0].mxu0
    %v907 = vpop.f32.mrb[0].mxu0
    %908 = vdwg.mxu0
    %909 = vst [vmem:[%s10] sm:$0x3] %v904
    %v910 = vpack.c.bf16 %v904, %v904
    %v911 = vld [vmem:[%s5] sm:$0xf]
    %v912 = vld [vmem:[%s5 + $0x4] sm:$0xf]
    %v913 = vld [vmem:[%s5 + $0x8] sm:$0xf]
    %v914 = vld [vmem:[%s5 + $0xc] sm:$0xf]
    %v915 = vld [vmem:[%s6] sm:$0x1]
    %v917 = vlaneseq
    %v918 = vshrl.u32 %v917, 7
    %v919 = vsub.s32 0, %v918
    %v920 = vrot.slane %v915, %v919
    %v926 = vunpack.c.l.b16 %v911
    %v927 = vunpack.c.l.b16 %v912
    %v928 = vunpack.c.l.b16 %v913
    %v929 = vunpack.c.l.b16 %v914
    %v930 = vpack.c.b16 %v927, %v926
    %v931 = vpack.c.b16 %v929, %v928
    %vm934 = vcmask 261120
    %v936 = vsel %vm934, %v910, 0
    %938 = vmatprep.subr.bf16.mxu0 0
    %939 = vmatpush1.bf16.msra.mxu0 %v930
    %940 = vmatprep.subr.bf16.mxu0 0
    %941 = vmatpush1.bf16.msra.mxu0 %v931
    %942 = vmatprep.subr.bf16.mxu0 0
    %943 = vmatpush1.bf16.msra.mxu0 0
    %944 = vmatprep.subr.bf16.mxu0 0
    %945 = vmatpush1.bf16.msra.mxu0 0
    %946 = vmatprep.subr.bf16.mxu0 0
    %947 = vmatpush1.bf16.msra.mxu0 0
    %948 = vmatprep.subr.bf16.mxu0 0
    %949 = vmatpush1.bf16.msra.mxu0 0
    %950 = vmatprep.subr.bf16.mxu0 0
    %951 = vmatpush1.bf16.msra.mxu0 0
    %952 = vmatprep.subr.bf16.mxu0 0
    %953 = vmatpush1.bf16.msra.mxu0 0
    %954 = vmatprep.subr.bf16.mxu0 0
    %955 = vmatpush1.bf16.msra.mxu0 0
    %956 = vmatprep.subr.bf16.mxu0 0
    %957 = vmatpush1.bf16.msra.mxu0 0
    %958 = vmatprep.subr.bf16.mxu0 0
    %959 = vmatpush1.bf16.msra.mxu0 0
    %960 = vmatprep.subr.bf16.mxu0 0
    %961 = vmatpush1.bf16.msra.mxu0 0
    %962 = vmatprep.subr.bf16.mxu0 0
    %963 = vmatpush1.bf16.msra.mxu0 0
    %964 = vmatprep.subr.bf16.mxu0 0
    %965 = vmatpush1.bf16.msra.mxu0 0
    %966 = vmatprep.subr.bf16.mxu0 0
    %967 = vmatpush1.bf16.msra.mxu0 0
    %968 = vmatprep.subr.bf16.mxu0 0
    %969 = vmatpush1.bf16.msra.mxu0 0
    %970 = vmatprep.mubr.bf16.mxu0 0
    %971 = vmatmul.mubr.bf16.gmra.mrb[0].mxu0 %v936
    %v972 = vpop.f32.mrb[0].mxu0
    %v973 = vadd.f32 %v920, %v972
    %v974 = vpop.f32.mrb[0].mxu0
    %v975 = vpop.f32.mrb[0].mxu0
    %v976 = vpop.f32.mrb[0].mxu0
    %977 = vdwg.mxu0
    %v978 = vmax.f32 %v973, 0.0
    %v979 = vpack.c.bf16 %v978, %v978
    %v980 = vld [vmem:[#allocation4] sm:$0xff]
    %v981 = vld [vmem:[#allocation4 + $0x8] sm:$0xff]
    %v982 = vld [vmem:[#allocation4 + $0x10] sm:$0xff]
    %v983 = vld [vmem:[#allocation4 + $0x18] sm:$0xff]
    %v984 = vld [vmem:[#allocation4 + $0x20] sm:$0xff]
    %v985 = vld [vmem:[#allocation4 + $0x28] sm:$0xff]
    %v986 = vld [vmem:[#allocation4 + $0x30] sm:$0xff]
    %v987 = vld [vmem:[#allocation4 + $0x38] sm:$0xff]
    %v988 = vld [vmem:[#allocation4 + $0x40] sm:$0xff]
    %v989 = vld [vmem:[#allocation4 + $0x48] sm:$0xff]
    %v990 = vld [vmem:[#allocation4 + $0x50] sm:$0xff]
    %v991 = vld [vmem:[#allocation4 + $0x58] sm:$0xff]
    %v992 = vld [vmem:[#allocation4 + $0x60] sm:$0xff]
    %v993 = vld [vmem:[#allocation4 + $0x68] sm:$0xff]
    %v994 = vld [vmem:[#allocation4 + $0x70] sm:$0xff]
    %v995 = vld [vmem:[#allocation4 + $0x78] sm:$0xff]
    %v996 = vld [vmem:[#allocation4 + $0x80] sm:$0xff]
    %v997 = vld [vmem:[#allocation4 + $0x88] sm:$0xff]
    %v998 = vld [vmem:[#allocation4 + $0x90] sm:$0xff]
    %v999 = vld [vmem:[#allocation4 + $0x98] sm:$0xff]
    %v1000 = vld [vmem:[#allocation4 + $0xa0] sm:$0xff]
    %v1001 = vld [vmem:[#allocation4 + $0xa8] sm:$0xff]
    %v1002 = vld [vmem:[#allocation4 + $0xb0] sm:$0xff]
    %v1003 = vld [vmem:[#allocation4 + $0xb8] sm:$0xff]
    %v1004 = vld [vmem:[#allocation4 + $0xc0] sm:$0xff]
    %v1005 = vld [vmem:[#allocation4 + $0xc8] sm:$0xff]
    %v1006 = vld [vmem:[#allocation4 + $0xd0] sm:$0xff]
    %v1007 = vld [vmem:[#allocation4 + $0xd8] sm:$0xff]
    %v1008 = vld [vmem:[#allocation4 + $0xe0] sm:$0xff]
    %v1009 = vld [vmem:[#allocation4 + $0xe8] sm:$0xff]
    %v1010 = vld [vmem:[#allocation4 + $0xf0] sm:$0xff]
    %v1011 = vld [vmem:[#allocation4 + $0xf8] sm:$0xff]
    %v1012 = vld [vmem:[#allocation4 + $0x100] sm:$0xff]
    %v1013 = vld [vmem:[#allocation4 + $0x108] sm:$0xff]
    %v1014 = vld [vmem:[#allocation4 + $0x110] sm:$0xff]
    %v1015 = vld [vmem:[#allocation4 + $0x118] sm:$0xff]
    %v1016 = vld [vmem:[#allocation4 + $0x120] sm:$0xff]
    %v1017 = vld [vmem:[#allocation4 + $0x128] sm:$0xff]
    %v1018 = vld [vmem:[#allocation4 + $0x130] sm:$0xff]
    %v1019 = vld [vmem:[#allocation4 + $0x138] sm:$0xff]
    %v1020 = vld [vmem:[#allocation4 + $0x140] sm:$0xff]
    %v1021 = vld [vmem:[#allocation4 + $0x148] sm:$0xff]
    %v1022 = vld [vmem:[#allocation4 + $0x150] sm:$0xff]
    %v1023 = vld [vmem:[#allocation4 + $0x158] sm:$0xff]
    %v1024 = vld [vmem:[#allocation4 + $0x160] sm:$0xff]
    %v1025 = vld [vmem:[#allocation4 + $0x168] sm:$0xff]
    %v1026 = vld [vmem:[#allocation4 + $0x170] sm:$0xff]
    %v1027 = vld [vmem:[#allocation4 + $0x178] sm:$0xff]
    %v1028 = vld [vmem:[#allocation4 + $0x180] sm:$0xff]
    %v1029 = vld [vmem:[#allocation4 + $0x188] sm:$0xff]
    %v1030 = vld [vmem:[#allocation4 + $0x190] sm:$0xff]
    %v1031 = vld [vmem:[#allocation4 + $0x198] sm:$0xff]
    %v1032 = vld [vmem:[#allocation4 + $0x1a0] sm:$0xff]
    %v1033 = vld [vmem:[#allocation4 + $0x1a8] sm:$0xff]
    %v1034 = vld [vmem:[#allocation4 + $0x1b0] sm:$0xff]
    %v1035 = vld [vmem:[#allocation4 + $0x1b8] sm:$0xff]
    %v1036 = vld [vmem:[#allocation4 + $0x1c0] sm:$0xff]
    %v1037 = vld [vmem:[#allocation4 + $0x1c8] sm:$0xff]
    %v1038 = vld [vmem:[#allocation4 + $0x1d0] sm:$0xff]
    %v1039 = vld [vmem:[#allocation4 + $0x1d8] sm:$0xff]
    %v1040 = vld [vmem:[#allocation4 + $0x1e0] sm:$0xff]
    %v1041 = vld [vmem:[#allocation4 + $0x1e8] sm:$0xff]
    %v1042 = vld [vmem:[#allocation4 + $0x1f0] sm:$0xff]
    %v1043 = vld [vmem:[#allocation4 + $0x1f8] sm:$0xff]
    %v1044 = vld [vmem:[%s8] sm:$0xff]
    %v1046 = vlaneseq
    %v1047 = vshrl.u32 %v1046, 7
    %v1048 = vsub.s32 0, %v1047
    %v1049 = vrot.slane %v1044, %v1048
    %v1050 = vlaneseq
    %v1051 = vshrl.u32 %v1050, 7
    %v1052 = vsub.s32 1, %v1051
    %v1053 = vrot.slane %v1044, %v1052
    %v1054 = vlaneseq
    %v1055 = vshrl.u32 %v1054, 7
    %v1056 = vsub.s32 2, %v1055
    %v1057 = vrot.slane %v1044, %v1056
    %v1058 = vlaneseq
    %v1059 = vshrl.u32 %v1058, 7
    %v1060 = vsub.s32 3, %v1059
    %v1061 = vrot.slane %v1044, %v1060
    %v1062 = vlaneseq
    %v1063 = vshrl.u32 %v1062, 7
    %v1064 = vsub.s32 4, %v1063
    %v1065 = vrot.slane %v1044, %v1064
    %v1066 = vlaneseq
    %v1067 = vshrl.u32 %v1066, 7
    %v1068 = vsub.s32 5, %v1067
    %v1069 = vrot.slane %v1044, %v1068
    %v1070 = vlaneseq
    %v1071 = vshrl.u32 %v1070, 7
    %v1072 = vsub.s32 6, %v1071
    %v1073 = vrot.slane %v1044, %v1072
    %v1074 = vlaneseq
    %v1075 = vshrl.u32 %v1074, 7
    %v1076 = vsub.s32 7, %v1075
    %v1077 = vrot.slane %v1044, %v1076
    %v1150 = vunpack.c.l.b16 %v980
    %v1151 = vunpack.c.h.b16 %v980
    %v1152 = vunpack.c.l.b16 %v981
    %v1153 = vunpack.c.h.b16 %v981
    %v1154 = vunpack.c.l.b16 %v982
    %v1155 = vunpack.c.h.b16 %v982
    %v1156 = vunpack.c.l.b16 %v983
    %v1157 = vunpack.c.h.b16 %v983
    %v1158 = vunpack.c.l.b16 %v984
    %v1159 = vunpack.c.h.b16 %v984
    %v1160 = vunpack.c.l.b16 %v985
    %v1161 = vunpack.c.h.b16 %v985
    %v1162 = vunpack.c.l.b16 %v986
    %v1163 = vunpack.c.h.b16 %v986
    %v1164 = vunpack.c.l.b16 %v987
    %v1165 = vunpack.c.h.b16 %v987
    %v1166 = vunpack.c.l.b16 %v988
    %v1167 = vunpack.c.h.b16 %v988
    %v1168 = vunpack.c.l.b16 %v989
    %v1169 = vunpack.c.h.b16 %v989
    %v1170 = vunpack.c.l.b16 %v990
    %v1171 = vunpack.c.h.b16 %v990
    %v1172 = vunpack.c.l.b16 %v991
    %v1173 = vunpack.c.h.b16 %v991
    %v1174 = vunpack.c.l.b16 %v992
    %v1175 = vunpack.c.h.b16 %v992
    %v1176 = vunpack.c.l.b16 %v993
    %v1177 = vunpack.c.h.b16 %v993
    %v1178 = vunpack.c.l.b16 %v994
    %v1179 = vunpack.c.h.b16 %v994
    %v1180 = vunpack.c.l.b16 %v995
    %v1181 = vunpack.c.h.b16 %v995
    %v1182 = vunpack.c.l.b16 %v996
    %v1183 = vunpack.c.h.b16 %v996
    %v1184 = vunpack.c.l.b16 %v997
    %v1185 = vunpack.c.h.b16 %v997
    %v1186 = vunpack.c.l.b16 %v998
    %v1187 = vunpack.c.h.b16 %v998
    %v1188 = vunpack.c.l.b16 %v999
    %v1189 = vunpack.c.h.b16 %v999
    %v1190 = vunpack.c.l.b16 %v1000
    %v1191 = vunpack.c.h.b16 %v1000
    %v1192 = vunpack.c.l.b16 %v1001
    %v1193 = vunpack.c.h.b16 %v1001
    %v1194 = vunpack.c.l.b16 %v1002
    %v1195 = vunpack.c.h.b16 %v1002
    %v1196 = vunpack.c.l.b16 %v1003
    %v1197 = vunpack.c.h.b16 %v1003
    %v1198 = vunpack.c.l.b16 %v1004
    %v1199 = vunpack.c.h.b16 %v1004
    %v1200 = vunpack.c.l.b16 %v1005
    %v1201 = vunpack.c.h.b16 %v1005
    %v1202 = vunpack.c.l.b16 %v1006
    %v1203 = vunpack.c.h.b16 %v1006
    %v1204 = vunpack.c.l.b16 %v1007
    %v1205 = vunpack.c.h.b16 %v1007
    %v1206 = vunpack.c.l.b16 %v1008
    %v1207 = vunpack.c.h.b16 %v1008
    %v1208 = vunpack.c.l.b16 %v1009
    %v1209 = vunpack.c.h.b16 %v1009
    %v1210 = vunpack.c.l.b16 %v1010
    %v1211 = vunpack.c.h.b16 %v1010
    %v1212 = vunpack.c.l.b16 %v1011
    %v1213 = vunpack.c.h.b16 %v1011
    %v1214 = vunpack.c.l.b16 %v1012
    %v1215 = vunpack.c.h.b16 %v1012
    %v1216 = vunpack.c.l.b16 %v1013
    %v1217 = vunpack.c.h.b16 %v1013
    %v1218 = vunpack.c.l.b16 %v1014
    %v1219 = vunpack.c.h.b16 %v1014
    %v1220 = vunpack.c.l.b16 %v1015
    %v1221 = vunpack.c.h.b16 %v1015
    %v1222 = vunpack.c.l.b16 %v1016
    %v1223 = vunpack.c.h.b16 %v1016
    %v1224 = vunpack.c.l.b16 %v1017
    %v1225 = vunpack.c.h.b16 %v1017
    %v1226 = vunpack.c.l.b16 %v1018
    %v1227 = vunpack.c.h.b16 %v1018
    %v1228 = vunpack.c.l.b16 %v1019
    %v1229 = vunpack.c.h.b16 %v1019
    %v1230 = vunpack.c.l.b16 %v1020
    %v1231 = vunpack.c.h.b16 %v1020
    %v1232 = vunpack.c.l.b16 %v1021
    %v1233 = vunpack.c.h.b16 %v1021
    %v1234 = vunpack.c.l.b16 %v1022
    %v1235 = vunpack.c.h.b16 %v1022
    %v1236 = vunpack.c.l.b16 %v1023
    %v1237 = vunpack.c.h.b16 %v1023
    %v1238 = vunpack.c.l.b16 %v1024
    %v1239 = vunpack.c.h.b16 %v1024
    %v1240 = vunpack.c.l.b16 %v1025
    %v1241 = vunpack.c.h.b16 %v1025
    %v1242 = vunpack.c.l.b16 %v1026
    %v1243 = vunpack.c.h.b16 %v1026
    %v1244 = vunpack.c.l.b16 %v1027
    %v1245 = vunpack.c.h.b16 %v1027
    %v1246 = vunpack.c.l.b16 %v1028
    %v1247 = vunpack.c.h.b16 %v1028
    %v1248 = vunpack.c.l.b16 %v1029
    %v1249 = vunpack.c.h.b16 %v1029
    %v1250 = vunpack.c.l.b16 %v1030
    %v1251 = vunpack.c.h.b16 %v1030
    %v1252 = vunpack.c.l.b16 %v1031
    %v1253 = vunpack.c.h.b16 %v1031
    %v1254 = vunpack.c.l.b16 %v1032
    %v1255 = vunpack.c.h.b16 %v1032
    %v1256 = vunpack.c.l.b16 %v1033
    %v1257 = vunpack.c.h.b16 %v1033
    %v1258 = vunpack.c.l.b16 %v1034
    %v1259 = vunpack.c.h.b16 %v1034
    %v1260 = vunpack.c.l.b16 %v1035
    %v1261 = vunpack.c.h.b16 %v1035
    %v1262 = vunpack.c.l.b16 %v1036
    %v1263 = vunpack.c.h.b16 %v1036
    %v1264 = vunpack.c.l.b16 %v1037
    %v1265 = vunpack.c.h.b16 %v1037
    %v1266 = vunpack.c.l.b16 %v1038
    %v1267 = vunpack.c.h.b16 %v1038
    %v1268 = vunpack.c.l.b16 %v1039
    %v1269 = vunpack.c.h.b16 %v1039
    %v1270 = vunpack.c.l.b16 %v1040
    %v1271 = vunpack.c.h.b16 %v1040
    %v1272 = vunpack.c.l.b16 %v1041
    %v1273 = vunpack.c.h.b16 %v1041
    %v1274 = vunpack.c.l.b16 %v1042
    %v1275 = vunpack.c.h.b16 %v1042
    %v1276 = vunpack.c.l.b16 %v1043
    %v1277 = vunpack.c.h.b16 %v1043
    %v1278 = vpack.c.b16 %v1158, %v1150
    %v1279 = vpack.c.b16 %v1159, %v1151
    %v1280 = vpack.c.b16 %v1160, %v1152
    %v1281 = vpack.c.b16 %v1161, %v1153
    %v1282 = vpack.c.b16 %v1162, %v1154
    %v1283 = vpack.c.b16 %v1163, %v1155
    %v1284 = vpack.c.b16 %v1164, %v1156
    %v1285 = vpack.c.b16 %v1165, %v1157
    %v1286 = vpack.c.b16 %v1174, %v1166
    %v1287 = vpack.c.b16 %v1175, %v1167
    %v1288 = vpack.c.b16 %v1176, %v1168
    %v1289 = vpack.c.b16 %v1177, %v1169
    %v1290 = vpack.c.b16 %v1178, %v1170
    %v1291 = vpack.c.b16 %v1179, %v1171
    %v1292 = vpack.c.b16 %v1180, %v1172
    %v1293 = vpack.c.b16 %v1181, %v1173
    %v1294 = vpack.c.b16 %v1190, %v1182
    %v1295 = vpack.c.b16 %v1191, %v1183
    %v1296 = vpack.c.b16 %v1192, %v1184
    %v1297 = vpack.c.b16 %v1193, %v1185
    %v1298 = vpack.c.b16 %v1194, %v1186
    %v1299 = vpack.c.b16 %v1195, %v1187
    %v1300 = vpack.c.b16 %v1196, %v1188
    %v1301 = vpack.c.b16 %v1197, %v1189
    %v1302 = vpack.c.b16 %v1206, %v1198
    %v1303 = vpack.c.b16 %v1207, %v1199
    %v1304 = vpack.c.b16 %v1208, %v1200
    %v1305 = vpack.c.b16 %v1209, %v1201
    %v1306 = vpack.c.b16 %v1210, %v1202
    %v1307 = vpack.c.b16 %v1211, %v1203
    %v1308 = vpack.c.b16 %v1212, %v1204
    %v1309 = vpack.c.b16 %v1213, %v1205
    %v1310 = vpack.c.b16 %v1222, %v1214
    %v1311 = vpack.c.b16 %v1223, %v1215
    %v1312 = vpack.c.b16 %v1224, %v1216
    %v1313 = vpack.c.b16 %v1225, %v1217
    %v1314 = vpack.c.b16 %v1226, %v1218
    %v1315 = vpack.c.b16 %v1227, %v1219
    %v1316 = vpack.c.b16 %v1228, %v1220
    %v1317 = vpack.c.b16 %v1229, %v1221
    %v1318 = vpack.c.b16 %v1238, %v1230
    %v1319 = vpack.c.b16 %v1239, %v1231
    %v1320 = vpack.c.b16 %v1240, %v1232
    %v1321 = vpack.c.b16 %v1241, %v1233
    %v1322 = vpack.c.b16 %v1242, %v1234
    %v1323 = vpack.c.b16 %v1243, %v1235
    %v1324 = vpack.c.b16 %v1244, %v1236
    %v1325 = vpack.c.b16 %v1245, %v1237
    %v1326 = vpack.c.b16 %v1254, %v1246
    %v1327 = vpack.c.b16 %v1255, %v1247
    %v1328 = vpack.c.b16 %v1256, %v1248
    %v1329 = vpack.c.b16 %v1257, %v1249
    %v1330 = vpack.c.b16 %v1258, %v1250
    %v1331 = vpack.c.b16 %v1259, %v1251
    %v1332 = vpack.c.b16 %v1260, %v1252
    %v1333 = vpack.c.b16 %v1261, %v1253
    %v1334 = vpack.c.b16 %v1270, %v1262
    %v1335 = vpack.c.b16 %v1271, %v1263
    %v1336 = vpack.c.b16 %v1272, %v1264
    %v1337 = vpack.c.b16 %v1273, %v1265
    %v1338 = vpack.c.b16 %v1274, %v1266
    %v1339 = vpack.c.b16 %v1275, %v1267
    %v1340 = vpack.c.b16 %v1276, %v1268
    %v1341 = vpack.c.b16 %v1277, %v1269
    %1406 = vmatprep.subr.bf16.mxu0 %v1279
    %1407 = vmatpush1.bf16.msra.mxu0 %v1278
    %1408 = vmatprep.subr.bf16.mxu0 %v1287
    %1409 = vmatpush1.bf16.msra.mxu0 %v1286
    %1410 = vmatprep.subr.bf16.mxu0 %v1295
    %1411 = vmatpush1.bf16.msra.mxu0 %v1294
    %1412 = vmatprep.subr.bf16.mxu0 %v1303
    %1413 = vmatpush1.bf16.msra.mxu0 %v1302
    %1414 = vmatprep.subr.bf16.mxu0 %v1311
    %1415 = vmatpush1.bf16.msra.mxu0 %v1310
    %1416 = vmatprep.subr.bf16.mxu0 %v1319
    %1417 = vmatpush1.bf16.msra.mxu0 %v1318
    %1418 = vmatprep.subr.bf16.mxu0 %v1327
    %1419 = vmatpush1.bf16.msra.mxu0 %v1326
    %1420 = vmatprep.subr.bf16.mxu0 %v1335
    %1421 = vmatpush1.bf16.msra.mxu0 %v1334
    %1422 = vmatprep.subr.bf16.mxu0 0
    %1423 = vmatpush1.bf16.msra.mxu0 0
    %1424 = vmatprep.subr.bf16.mxu0 0
    %1425 = vmatpush1.bf16.msra.mxu0 0
    %1426 = vmatprep.subr.bf16.mxu0 0
    %1427 = vmatpush1.bf16.msra.mxu0 0
    %1428 = vmatprep.subr.bf16.mxu0 0
    %1429 = vmatpush1.bf16.msra.mxu0 0
    %1430 = vmatprep.subr.bf16.mxu0 0
    %1431 = vmatpush1.bf16.msra.mxu0 0
    %1432 = vmatprep.subr.bf16.mxu0 0
    %1433 = vmatpush1.bf16.msra.mxu0 0
    %1434 = vmatprep.subr.bf16.mxu0 0
    %1435 = vmatpush1.bf16.msra.mxu0 0
    %1436 = vmatprep.subr.bf16.mxu0 0
    %1437 = vmatpush1.bf16.msra.mxu0 0
    %1438 = vmatprep.mubr.bf16.mxu0 0
    %1439 = vmatmul.mubr.bf16.gmra.mrb[0].mxu0 %v979
    %v1440 = vpop.f32.mrb[0].mxu0
    %v1441 = vadd.f32 %v1049, %v1440
    %v1442 = vpop.f32.mrb[0].mxu0
    %v1443 = vadd.f32 %v1053, %v1442
    %v1444 = vpop.f32.mrb[0].mxu0
    %v1445 = vpop.f32.mrb[0].mxu0
    %1446 = vdwg.mxu0
    %1447 = vmatprep.subr.bf16.mxu0 %v1281
    %1448 = vmatpush1.bf16.msra.mxu0 %v1280
    %1449 = vmatprep.subr.bf16.mxu0 %v1289
    %1450 = vmatpush1.bf16.msra.mxu0 %v1288
    %1451 = vmatprep.subr.bf16.mxu0 %v1297
    %1452 = vmatpush1.bf16.msra.mxu0 %v1296
    %1453 = vmatprep.subr.bf16.mxu0 %v1305
    %1454 = vmatpush1.bf16.msra.mxu0 %v1304
    %1455 = vmatprep.subr.bf16.mxu0 %v1313
    %1456 = vmatpush1.bf16.msra.mxu0 %v1312
    %1457 = vmatprep.subr.bf16.mxu0 %v1321
    %1458 = vmatpush1.bf16.msra.mxu0 %v1320
    %1459 = vmatprep.subr.bf16.mxu0 %v1329
    %1460 = vmatpush1.bf16.msra.mxu0 %v1328
    %1461 = vmatprep.subr.bf16.mxu0 %v1337
    %1462 = vmatpush1.bf16.msra.mxu0 %v1336
    %1463 = vmatprep.subr.bf16.mxu0 0
    %1464 = vmatpush1.bf16.msra.mxu0 0
    %1465 = vmatprep.subr.bf16.mxu0 0
    %1466 = vmatpush1.bf16.msra.mxu0 0
    %1467 = vmatprep.subr.bf16.mxu0 0
    %1468 = vmatpush1.bf16.msra.mxu0 0
    %1469 = vmatprep.subr.bf16.mxu0 0
    %1470 = vmatpush1.bf16.msra.mxu0 0
    %1471 = vmatprep.subr.bf16.mxu0 0
    %1472 = vmatpush1.bf16.msra.mxu0 0
    %1473 = vmatprep.subr.bf16.mxu0 0
    %1474 = vmatpush1.bf16.msra.mxu0 0
    %1475 = vmatprep.subr.bf16.mxu0 0
    %1476 = vmatpush1.bf16.msra.mxu0 0
    %1477 = vmatprep.subr.bf16.mxu0 0
    %1478 = vmatpush1.bf16.msra.mxu0 0
    %1479 = vmatprep.mubr.bf16.mxu0 0
    %1480 = vmatmul.mubr.bf16.gmra.mrb[0].mxu0 %v979
    %v1481 = vpop.f32.mrb[0].mxu0
    %v1482 = vadd.f32 %v1057, %v1481
    %v1483 = vpop.f32.mrb[0].mxu0
    %v1484 = vadd.f32 %v1061, %v1483
    %v1485 = vpop.f32.mrb[0].mxu0
    %v1486 = vpop.f32.mrb[0].mxu0
    %1487 = vdwg.mxu0
    %1488 = vmatprep.subr.bf16.mxu0 %v1283
    %1489 = vmatpush1.bf16.msra.mxu0 %v1282
    %1490 = vmatprep.subr.bf16.mxu0 %v1291
    %1491 = vmatpush1.bf16.msra.mxu0 %v1290
    %1492 = vmatprep.subr.bf16.mxu0 %v1299
    %1493 = vmatpush1.bf16.msra.mxu0 %v1298
    %1494 = vmatprep.subr.bf16.mxu0 %v1307
    %1495 = vmatpush1.bf16.msra.mxu0 %v1306
    %1496 = vmatprep.subr.bf16.mxu0 %v1315
    %1497 = vmatpush1.bf16.msra.mxu0 %v1314
    %1498 = vmatprep.subr.bf16.mxu0 %v1323
    %1499 = vmatpush1.bf16.msra.mxu0 %v1322
    %1500 = vmatprep.subr.bf16.mxu0 %v1331
    %1501 = vmatpush1.bf16.msra.mxu0 %v1330
    %1502 = vmatprep.subr.bf16.mxu0 %v1339
    %1503 = vmatpush1.bf16.msra.mxu0 %v1338
    %1504 = vmatprep.subr.bf16.mxu0 0
    %1505 = vmatpush1.bf16.msra.mxu0 0
    %1506 = vmatprep.subr.bf16.mxu0 0
    %1507 = vmatpush1.bf16.msra.mxu0 0
    %1508 = vmatprep.subr.bf16.mxu0 0
    %1509 = vmatpush1.bf16.msra.mxu0 0
    %1510 = vmatprep.subr.bf16.mxu0 0
    %1511 = vmatpush1.bf16.msra.mxu0 0
    %1512 = vmatprep.subr.bf16.mxu0 0
    %1513 = vmatpush1.bf16.msra.mxu0 0
    %1514 = vmatprep.subr.bf16.mxu0 0
    %1515 = vmatpush1.bf16.msra.mxu0 0
    %1516 = vmatprep.subr.bf16.mxu0 0
    %1517 = vmatpush1.bf16.msra.mxu0 0
    %1518 = vmatprep.subr.bf16.mxu0 0
    %1519 = vmatpush1.bf16.msra.mxu0 0
    %1520 = vmatprep.mubr.bf16.mxu0 0
    %1521 = vmatmul.mubr.bf16.gmra.mrb[0].mxu0 %v979
    %v1522 = vpop.f32.mrb[0].mxu0
    %v1523 = vadd.f32 %v1065, %v1522
    %v1524 = vpop.f32.mrb[0].mxu0
    %v1525 = vadd.f32 %v1069, %v1524
    %v1526 = vpop.f32.mrb[0].mxu0
    %v1527 = vpop.f32.mrb[0].mxu0
    %1528 = vdwg.mxu0
    %1529 = vmatprep.subr.bf16.mxu0 %v1285
    %1530 = vmatpush1.bf16.msra.mxu0 %v1284
    %1531 = vmatprep.subr.bf16.mxu0 %v1293
    %1532 = vmatpush1.bf16.msra.mxu0 %v1292
    %1533 = vmatprep.subr.bf16.mxu0 %v1301
    %1534 = vmatpush1.bf16.msra.mxu0 %v1300
    %1535 = vmatprep.subr.bf16.mxu0 %v1309
    %1536 = vmatpush1.bf16.msra.mxu0 %v1308
    %1537 = vmatprep.subr.bf16.mxu0 %v1317
    %1538 = vmatpush1.bf16.msra.mxu0 %v1316
    %1539 = vmatprep.subr.bf16.mxu0 %v1325
    %1540 = vmatpush1.bf16.msra.mxu0 %v1324
    %1541 = vmatprep.subr.bf16.mxu0 %v1333
    %1542 = vmatpush1.bf16.msra.mxu0 %v1332
    %1543 = vmatprep.subr.bf16.mxu0 %v1341
    %1544 = vmatpush1.bf16.msra.mxu0 %v1340
    %1545 = vmatprep.subr.bf16.mxu0 0
    %1546 = vmatpush1.bf16.msra.mxu0 0
    %1547 = vmatprep.subr.bf16.mxu0 0
    %1548 = vmatpush1.bf16.msra.mxu0 0
    %1549 = vmatprep.subr.bf16.mxu0 0
    %1550 = vmatpush1.bf16.msra.mxu0 0
    %1551 = vmatprep.subr.bf16.mxu0 0
    %1552 = vmatpush1.bf16.msra.mxu0 0
    %1553 = vmatprep.subr.bf16.mxu0 0
    %1554 = vmatpush1.bf16.msra.mxu0 0
    %1555 = vmatprep.subr.bf16.mxu0 0
    %1556 = vmatpush1.bf16.msra.mxu0 0
    %1557 = vmatprep.subr.bf16.mxu0 0
    %1558 = vmatpush1.bf16.msra.mxu0 0
    %1559 = vmatprep.subr.bf16.mxu0 0
    %1560 = vmatpush1.bf16.msra.mxu0 0
    %1561 = vmatprep.mubr.bf16.mxu0 0
    %1562 = vmatmul.mubr.bf16.gmra.mrb[0].mxu0 %v979
    %v1563 = vpop.f32.mrb[0].mxu0
    %v1564 = vadd.f32 %v1073, %v1563
    %v1565 = vpop.f32.mrb[0].mxu0
    %v1566 = vadd.f32 %v1077, %v1565
    %v1567 = vpop.f32.mrb[0].mxu0
    %v1568 = vpop.f32.mrb[0].mxu0
    %1569 = vdwg.mxu0
    %v1570 = vxor.u32 %v1441, 2147483648
    %v1571 = vxor.u32 %v1443, 2147483648
    %v1572 = vxor.u32 %v1482, 2147483648
    %v1573 = vxor.u32 %v1484, 2147483648
    %v1574 = vxor.u32 %v1523, 2147483648
    %v1575 = vxor.u32 %v1525, 2147483648
    %v1576 = vxor.u32 %v1564, 2147483648
    %v1577 = vxor.u32 %v1566, 2147483648
    %v1578 = vmul.f32 %v1570, 1.442695
    %v1579 = vpow.pop %v1578
    %v1580 = vmul.f32 %v1571, 1.442695
    %v1581 = vpow.pop %v1580
    %v1582 = vmul.f32 %v1572, 1.442695
    %v1583 = vpow.pop %v1582
    %v1584 = vmul.f32 %v1573, 1.442695
    %v1585 = vpow.pop %v1584
    %v1586 = vmul.f32 %v1574, 1.442695
    %v1587 = vpow.pop %v1586
    %v1588 = vmul.f32 %v1575, 1.442695
    %v1589 = vpow.pop %v1588
    %v1590 = vmul.f32 %v1576, 1.442695
    %v1591 = vpow.pop %v1590
    %v1592 = vmul.f32 %v1577, 1.442695
    %v1593 = vpow.pop %v1592
    %v1594 = vadd.f32 %v1579, 1.0
    %v1595 = vadd.f32 %v1581, 1.0
    %v1596 = vadd.f32 %v1583, 1.0
    %v1597 = vadd.f32 %v1585, 1.0
    %v1598 = vadd.f32 %v1587, 1.0
    %v1599 = vadd.f32 %v1589, 1.0
    %v1600 = vadd.f32 %v1591, 1.0
    %v1601 = vadd.f32 %v1593, 1.0
    %v1602 = vrcp.pop %v1594
    %v1603 = vmul.f32 1.0, %v1602
    %v1604 = vrcp.pop %v1595
    %v1605 = vmul.f32 1.0, %v1604
    %v1606 = vrcp.pop %v1596
    %v1607 = vmul.f32 1.0, %v1606
    %v1608 = vrcp.pop %v1597
    %v1609 = vmul.f32 1.0, %v1608
    %v1610 = vrcp.pop %v1598
    %v1611 = vmul.f32 1.0, %v1610
    %v1612 = vrcp.pop %v1599
    %v1613 = vmul.f32 1.0, %v1612
    %v1614 = vrcp.pop %v1600
    %v1615 = vmul.f32 1.0, %v1614
    %v1616 = vrcp.pop %v1601
    %v1617 = vmul.f32 1.0, %v1616
    %v1626 = vcombine.low %v1603, %v1605
    %v1627 = vcombine.low %v1607, %v1609
    %v1629 = vunpack.c.l.s4 1983009808
    %v1630 = vunpack.c.0.s8 %v1629
    %v1631 = vlaneseq
    %v1632 = vshrl.u32 %v1631, 7
    %v1633 = vsub.s32 %v1630, %v1632
    %v1634 = vrot.slane %v1626, %v1633
    %v1636 = vunpack.c.l.s4 1983009808
    %v1637 = vunpack.c.0.s8 %v1636
    %v1638 = vlaneseq
    %v1639 = vshrl.u32 %v1638, 7
    %v1640 = vsub.s32 %v1637, %v1639
    %v1641 = vrot.slane %v1627, %v1640
    %v1642 = vcombine.low %v1634, %v1641
    %v1643 = vcombine.low %v1611, %v1613
    %v1644 = vcombine.low %v1615, %v1617
    %v1646 = vunpack.c.l.s4 1983009808
    %v1647 = vunpack.c.0.s8 %v1646
    %v1648 = vlaneseq
    %v1649 = vshrl.u32 %v1648, 7
    %v1650 = vsub.s32 %v1647, %v1649
    %v1651 = vrot.slane %v1643, %v1650
    %v1653 = vunpack.c.l.s4 1983009808
    %v1654 = vunpack.c.0.s8 %v1653
    %v1655 = vlaneseq
    %v1656 = vshrl.u32 %v1655, 7
    %v1657 = vsub.s32 %v1654, %v1656
    %v1658 = vrot.slane %v1644, %v1657
    %v1659 = vcombine.low %v1651, %v1658
    %1662 = vst [vmem:[%s9] sm:$0xff] %v1642
    %1663 = vst [vmem:[%s9 + $0x8] sm:$0xff] %v1659
    // Predicated region
    $region46: #{base_vae_forward.1} parent=1 // pred_check
      _
    $region47: #{base_vae_forward.1} parent=1 // pred_check_branch
      %1665 = sbr.rel (0) target = $region49
    $region48: #{base_vae_forward.1} parent=1 // pred_region
      _
    $region49: #{base_vae_forward.1} parent=1 // pred_fallthru
      _
    // Predicated region
    $region50: #{base_vae_forward.1} parent=1 // pred_check
      _
    $region51: #{base_vae_forward.1} parent=1 // pred_check_branch
      %1667 = sbr.rel (0) target = $region53
    $region52: #{base_vae_forward.1} parent=1 // pred_region
      _
    $region53: #{base_vae_forward.1} parent=1 // pred_fallthru
      _
    // Predicated region
    $region54: #{base_vae_forward.1} parent=1 // pred_check
      _
    $region55: #{base_vae_forward.1} parent=1 // pred_check_branch
      %1669 = sbr.rel (0) target = $region57
    $region56: #{base_vae_forward.1} parent=1 // pred_region
      _
    $region57: #{base_vae_forward.1} parent=1 // pred_fallthru
      _
    // Predicated region
    $region58: #{base_vae_forward.1} parent=1 // pred_check
      _
    $region59: #{base_vae_forward.1} parent=1 // pred_check_branch
      %1671 = sbr.rel (0) target = $region61
    $region60: #{base_vae_forward.1} parent=1 // pred_region
      _
    $region61: #{base_vae_forward.1} parent=1 // pred_fallthru
      _
    %1672 = vsyncpa [#allocation3], 1
    %1673 = vsyncpa [#allocation5], 1

</llo_original>
